<compile_context>
chip_gen: v7x
topology: tpu7x:2x2x1
jax: 0.10.0
libtpu: 0.0.40
codegen_flags: <defaults>
</compile_context>

<pallas_src>
import functools

import jax
import jax.numpy as jnp
from jax.experimental import pallas as pl
from jax.experimental.pallas import tpu as pltpu


def _round_up(n, m):
    return ((n + m - 1) // m) * m


# ----------------------------------------------------------------------------
# Shared in-kernel body: one Decoder.forward_step (LSTM over T steps + MLP head).
# Gates are packed along lanes: order [i, f, g, o] at lane offsets [0,H,2H,3H).
# ----------------------------------------------------------------------------
def _lstm_mlp_step(x2d, h, c, wih, whh, b, w1, b1, w2, b2, w3, b3, *, T, Nb, H):
    """x2d: (T*Nb, I) time-major rows.  h, c: (Nb, H).  Returns (Nb, 1)."""
    # Hoisted input projection: ONE matmul + ONE bias broadcast for all gates/timesteps.
    xp = (jnp.dot(x2d, wih, preferred_element_type=jnp.float32) + b).reshape(T, Nb, 4 * H)

    # Serial recurrence, fully unrolled (T is static & small).  One packed (Nb,H)@(H,4H)
    # matmul per step; one full-lane sigmoid; tanh only on the g slice.
    for t in range(T):
        gates = xp[t] + jnp.dot(h, whh, preferred_element_type=jnp.float32)   # (Nb, 4H)
        sg = jax.nn.sigmoid(gates)                                            # i, f, o (g unused)
        g_g = jnp.tanh(gates[:, 2 * H:3 * H])
        c = sg[:, H:2 * H] * c + sg[:, 0:H] * g_g
        h = sg[:, 3 * H:4 * H] * jnp.tanh(c)

    # MLP head: relu(h) -> fc1 -> relu -> fc2 -> relu -> fc3 (weights lane-padded with zeros).
    out = jnp.maximum(h, 0.0)
    out = jnp.maximum(jnp.dot(out, w1, preferred_element_type=jnp.float32) + b1, 0.0)
    out = jnp.maximum(jnp.dot(out, w2, preferred_element_type=jnp.float32) + b2, 0.0)
    # fc3 has a single output feature: VPU multiply + lane reduce (zero-padded lanes exact).
    return jnp.sum(out * w3, axis=-1, keepdims=True) + b3                     # (Nb, 1)


# ----------------------------------------------------------------------------
# Kernel 1: teacher-forced path — one forward_step over the (folded) batch block.
# ----------------------------------------------------------------------------
def _decoder_tf_kernel(x_ref, h0_ref, c0_ref, wih_ref, whh_ref, b_ref,
                       w1_ref, b1_ref, w2_ref, b2_ref, w3_ref, b3_ref,
                       out_ref, *, seq_len, hidden_size):
    T, H = seq_len, hidden_size
    x = x_ref[...]                                     # (T, Nb, I) time-major
    Nb, I = x.shape[1], x.shape[2]
    o = _lstm_mlp_step(x.reshape(T * Nb, I), h0_ref[...], c0_ref[...],
                       wih_ref[...], whh_ref[...], b_ref[...],
                       w1_ref[...], b1_ref[...], w2_ref[...], b2_ref[...],
                       w3_ref[...], b3_ref[...], T=T, Nb=Nb, H=H)
    out_ref[...] = o.astype(out_ref.dtype)


# ----------------------------------------------------------------------------
# Kernel 2: autoregressive path (seq_len*input_size == 1) — all 5 decode steps
# fused in one kernel; weights stay resident, one launch.
# ----------------------------------------------------------------------------
def _decoder_ar_kernel(x_ref, h0_ref, c0_ref, wih_ref, whh_ref, b_ref,
                       w1_ref, b1_ref, w2_ref, b2_ref, w3_ref, b3_ref,
                       out_ref, *, hidden_size, num_steps):
    H = hidden_size
    h0, c0 = h0_ref[...], c0_ref[...]
    wih, whh, b = wih_ref[...], whh_ref[...], b_ref[...]
    w1, b1, w2, b2 = w1_ref[...], b1_ref[...], w2_ref[...], b2_ref[...]
    w3, b3 = w3_ref[...], b3_ref[...]
    xin = x_ref[...]                                   # (Nb, 1): T = I = 1
    Nb = xin.shape[0]
    for s in range(num_steps):
        # hidden state is reset to encoded_hidden every step (as in the PyTorch module).
        o = _lstm_mlp_step(xin, h0, c0, wih, whh, b, w1, b1, w2, b2, w3, b3,
                           T=1, Nb=Nb, H=H)
        out_ref[:, s:s + 1] = o.astype(out_ref.dtype)
        xin = o                                        # feed the step output back


# ----------------------------------------------------------------------------
# Wrappers
# ----------------------------------------------------------------------------
_LANE = 128


def _prepare_kernel_params(params, hidden_size):
    """Lane-pack / lane-pad weights for the kernels (zero padding keeps math exact)."""
    def pad2d(a, rows, cols):
        return jnp.pad(a.astype(jnp.float32), ((0, rows - a.shape[0]), (0, cols - a.shape[1])))

    H = hidden_size
    l1 = _round_up(100, _LANE)   # fc1 width 100 -> 128
    l2 = _round_up(50, _LANE)    # fc2 width 50  -> 128
    return dict(
        wih=params["w_ih"].astype(jnp.float32),        # (I, 4H) packed gates [i,f,g,o]
        whh=params["w_hh"].astype(jnp.float32),        # (H, 4H)
        b=params["b_lstm"].astype(jnp.float32),        # (1, 4H) = b_ih + b_hh
        w1=pad2d(params["w1"], H, l1), b1=pad2d(params["b1"], 1, l1),
        w2=pad2d(params["w2"], l1, l2), b2=pad2d(params["b2"], 1, l2),
        w3row=pad2d(params["w3"].T, 1, l2),            # fc3 weight as a lane row
        b3=params["b3"].astype(jnp.float32),           # (1, 1)
    )


def _decoder_step_batch(x_nti, h0, c0, kp, *, seq_len, input_size, hidden_size):
    """One Decoder.forward_step over an (N, T, I) batch via a single gridded pallas_call."""
    N = x_nti.shape[0]
    T, I, H = seq_len, input_size, hidden_size

    # Pad batch to a sublane multiple; one block covers the whole batch unless it is large,
    # in which case the grid (marked "parallel") shards blocks across TensorCores (v7x).
    n8 = _round_up(N, 8)
    block_n = n8 if n8 <= 512 else 512
    Np = _round_up(N, block_n)
    grid_n = Np // block_n

    if Np != N:
        x_nti = jnp.pad(x_nti, ((0, Np - N), (0, 0), (0, 0)))
        h0 = jnp.pad(h0, ((0, Np - N), (0, 0)))
        c0 = jnp.pad(c0, ((0, Np - N), (0, 0)))
    x_tni = jnp.transpose(x_nti, (1, 0, 2)).astype(jnp.float32)           # (T, Np, I) time-major

    weights = (kp["wih"], kp["whh"], kp["b"], kp["w1"], kp["b1"],
               kp["w2"], kp["b2"], kp["w3row"], kp["b3"])
    args = (x_tni, h0.astype(jnp.float32), c0.astype(jnp.float32)) + weights

    def resident(shape):           # whole-array block, same block index every grid step
        return pl.BlockSpec(shape, lambda i, _n=len(shape): (0,) * _n)

    in_specs = [
        pl.BlockSpec((T, block_n, I), lambda i: (0, i, 0)),
        pl.BlockSpec((block_n, H), lambda i: (i, 0)),
        pl.BlockSpec((block_n, H), lambda i: (i, 0)),
    ] + [resident(w.shape) for w in weights]
    out_specs = pl.BlockSpec((block_n, 1), lambda i: (i, 0))

    flops = int(2 * T * Np * I * 4 * H          # hoisted input projection
                + 2 * T * Np * H * 4 * H        # packed recurrent matmuls
                + 2 * Np * (H * 128 + 128 * 128 + 128)   # padded MLP head
                + 10 * T * Np * H)              # gate elementwise (approx)
    transcendentals = int(6 * H * T * Np)
    bytes_accessed = int(4 * (sum(a.size for a in args) + Np))

    out = pl.pallas_call(
        functools.partial(_decoder_tf_kernel, seq_len=T, hidden_size=H),
        out_shape=jax.ShapeDtypeStruct((Np, 1), jnp.float32),
        grid=(grid_n,),
        in_specs=in_specs,
        out_specs=out_specs,
        compiler_params=pltpu.CompilerParams(dimension_semantics=("parallel",)),
        cost_estimate=pl.CostEstimate(flops=flops, transcendentals=transcendentals,
                                      bytes_accessed=bytes_accessed),
    )(*args)
    return out[:N]                                                         # (N, 1)


def _decoder_autoreg(x, h0, c0, kp, *, hidden_size, num_steps=5):
    """All 5 autoregressive decode steps fused into one pallas_call (needs D == 1)."""
    B = x.shape[0]
    Np = _round_up(B, 8)
    if Np != B:
        x = jnp.pad(x, ((0, Np - B), (0, 0)))
        h0 = jnp.pad(h0, ((0, Np - B), (0, 0)))
        c0 = jnp.pad(c0, ((0, Np - B), (0, 0)))
    args = (x.astype(jnp.float32), h0.astype(jnp.float32), c0.astype(jnp.float32),
            kp["wih"], kp["whh"], kp["b"], kp["w1"], kp["b1"], kp["w2"], kp["b2"],
            kp["w3row"], kp["b3"])
    vmem = pl.BlockSpec(memory_space=pltpu.MemorySpace.VMEM)
    out = pl.pallas_call(
        functools.partial(_decoder_ar_kernel, hidden_size=hidden_size, num_steps=num_steps),
        out_shape=jax.ShapeDtypeStruct((Np, num_steps), jnp.float32),
        in_specs=[vmem] * len(args),
        out_specs=vmem,
    )(*args)
    return out[:B]                                                         # (B, num_steps)


@functools.partial(jax.jit, static_argnames=("seq_len", "input_size", "hidden_size"))
def decoder_forward(x, encoded_hidden, params, *, seq_len, input_size, hidden_size,
                    target_tensor=None):
    """Equivalent of Decoder.forward (5 decode steps)."""
    h0, c0 = encoded_hidden                    # each (B, H) (PyTorch layer dim squeezed)
    B = x.shape[0]
    D = seq_len * input_size
    kp = _prepare_kernel_params(params, hidden_size)

    if target_tensor is not None:
        # Teacher forcing: the hidden state is re-used (reset) for all 5 steps and every
        # step input is known up front, so the 5 steps are independent -> fold into batch.
        step_inputs = jnp.concatenate([x.reshape(B, 1, D), target_tensor[:, :4]], axis=1)  # (B,5,D)
        x_fold = step_inputs.reshape(B * 5, seq_len, input_size)
        h0f = jnp.broadcast_to(h0[:, None, :], (B, 5, hidden_size)).reshape(B * 5, hidden_size)
        c0f = jnp.broadcast_to(c0[:, None, :], (B, 5, hidden_size)).reshape(B * 5, hidden_size)
        out = _decoder_step_batch(x_fold, h0f, c0f, kp, seq_len=seq_len,
                                  input_size=input_size, hidden_size=hidden_size)           # (B*5,1)
        return out.reshape(B, 5)

    if D == 1:
        # Autoregressive decode fused into a single kernel (weights resident, one launch).
        return _decoder_autoreg(x.reshape(B, 1), h0, c0, kp, hidden_size=hidden_size)

    # TODO(synk): like the original PyTorch module, the autoregressive path only
    # type-checks when seq_len * input_size == 1 (the (B, 1) step output is fed back
    # as the next (B, seq_len, input_size) LSTM input), so it is not implemented here.
    raise NotImplementedError("autoregressive decode requires seq_len * input_size == 1")


# ----------------------------------------------------------------------------
# Pure-JAX reference (numerical check of the kernels)
# ----------------------------------------------------------------------------
def _ref_step(x_seq, h0, c0, p, H):
    h, c = h0, c0
    for t in range(x_seq.shape[1]):
        gates = x_seq[:, t] @ p["w_ih"] + h @ p["w_hh"] + p["b_lstm"]
        i_g = jax.nn.sigmoid(gates[:, 0 * H:1 * H])
        f_g = jax.nn.sigmoid(gates[:, 1 * H:2 * H])
        g_g = jnp.tanh(gates[:, 2 * H:3 * H])
        o_g = jax.nn.sigmoid(gates[:, 3 * H:4 * H])
        c = f_g * c + i_g * g_g
        h = o_g * jnp.tanh(c)
    out = jnp.maximum(h, 0.0)
    out = jnp.maximum(out @ p["w1"] + p["b1"], 0.0)
    out = jnp.maximum(out @ p["w2"] + p["b2"], 0.0)
    return out @ p["w3"] + p["b3"]


def _ref_forward(x, enc, p, seq_len, input_size, H, target):
    h0, c0 = enc
    di = x
    outs = []
    for i in range(5):
        o = _ref_step(di.reshape(di.shape[0], seq_len, input_size), h0, c0, p, H)
        outs.append(o)
        di = target[:, i][:, None, :] if target is not None else o
    return jnp.concatenate(outs, axis=1)


def _make_params(keys, input_size, hidden, scale=0.1):
    return {
        # LSTM: gate order [i, f, g, o], stored transposed for x @ W
        "w_ih": jax.random.normal(keys[0], (input_size, 4 * hidden), jnp.float32) * scale,
        "w_hh": jax.random.normal(keys[1], (hidden, 4 * hidden), jnp.float32) * scale,
        "b_lstm": jax.random.normal(keys[2], (1, 4 * hidden), jnp.float32) * scale,  # b_ih + b_hh
        "w1": jax.random.normal(keys[3], (hidden, 100), jnp.float32) * scale,
        "b1": jax.random.normal(keys[4], (1, 100), jnp.float32) * scale,
        "w2": jax.random.normal(keys[5], (100, 50), jnp.float32) * scale,
        "b2": jax.random.normal(keys[6], (1, 50), jnp.float32) * scale,
        "w3": jax.random.normal(keys[7], (50, 1), jnp.float32) * scale,
        "b3": jax.random.normal(keys[8], (1, 1), jnp.float32) * scale,
    }


# ----------------------------------------------------------------------------
# Main
# ----------------------------------------------------------------------------
if __name__ == "__main__":
    # --- Test 1: teacher-forced decode (main path) ---
    B, INPUT_SIZE, SEQ_LEN, HIDDEN = 2, 4, 8, 32
    D = SEQ_LEN * INPUT_SIZE

    keys = jax.random.split(jax.random.PRNGKey(0), 16)
    params = _make_params(keys, INPUT_SIZE, HIDDEN)

    x = jax.random.normal(keys[9], (B, D), jnp.float32)                 # decoder input
    h0 = jax.random.normal(keys[10], (B, HIDDEN), jnp.float32)          # encoded hidden h
    c0 = jax.random.normal(keys[11], (B, HIDDEN), jnp.float32)          # encoded hidden c
    target = jax.random.normal(keys[12], (B, 5, D), jnp.float32)        # teacher-forcing targets

    out = decoder_forward(x, (h0, c0), params,
                          seq_len=SEQ_LEN, input_size=INPUT_SIZE, hidden_size=HIDDEN,
                          target_tensor=target)
    out = jax.block_until_ready(out)
    assert out.shape == (B, 5), out.shape

    ref = _ref_forward(x, (h0, c0), params, SEQ_LEN, INPUT_SIZE, HIDDEN, target)
    assert jnp.allclose(out, ref, rtol=1e-4, atol=1e-4), (out, ref)

    # --- Test 2: fused autoregressive decode (valid only when seq_len*input_size == 1) ---
    B2, I2, T2, H2 = 2, 1, 1, 32
    keys2 = jax.random.split(jax.random.PRNGKey(1), 16)
    params2 = _make_params(keys2, I2, H2)
    x2 = jax.random.normal(keys2[9], (B2, 1), jnp.float32)
    h02 = jax.random.normal(keys2[10], (B2, H2), jnp.float32)
    c02 = jax.random.normal(keys2[11], (B2, H2), jnp.float32)

    out2 = decoder_forward(x2, (h02, c02), params2,
                           seq_len=T2, input_size=I2, hidden_size=H2, target_tensor=None)
    out2 = jax.block_until_ready(out2)
    assert out2.shape == (B2, 5), out2.shape

    ref2 = _ref_forward(x2, (h02, c02), params2, T2, I2, H2, None)
    assert jnp.allclose(out2, ref2, rtol=1e-4, atol=1e-4), (out2, ref2)

    print("KERNEL_OK")
</pallas_src>

<mosaic_0001>
module attributes {stable_mosaic.version = 11 : i64} {
  func.func @_decoder_tf_kernel(%arg0: i32, %arg1: memref<8x16x4xf32, #tpu.memory_space<vmem>>, %arg2: memref<16x32xf32, #tpu.memory_space<vmem>>, %arg3: memref<16x32xf32, #tpu.memory_space<vmem>>, %arg4: memref<4x128xf32, #tpu.memory_space<vmem>>, %arg5: memref<32x128xf32, #tpu.memory_space<vmem>>, %arg6: memref<1x128xf32, #tpu.memory_space<vmem>>, %arg7: memref<32x128xf32, #tpu.memory_space<vmem>>, %arg8: memref<1x128xf32, #tpu.memory_space<vmem>>, %arg9: memref<128x128xf32, #tpu.memory_space<vmem>>, %arg10: memref<1x128xf32, #tpu.memory_space<vmem>>, %arg11: memref<1x128xf32, #tpu.memory_space<vmem>>, %arg12: memref<1x1xf32, #tpu.memory_space<vmem>>, %arg13: memref<16x1xf32, #tpu.memory_space<vmem>>) attributes {dimension_semantics = [#tpu.dimension_semantics<parallel>], iteration_bounds = array<i64: 1>, scalar_prefetch = 0 : i64, scratch_operands = 0 : i64, tpu.core_type = #tpu.core_type<tc>, window_params = [{transform_indices = @transform_0, window_bounds = array<i64: 8, 16, 4>}, {transform_indices = @transform_1, window_bounds = array<i64: 16, 32>}, {transform_indices = @transform_2, window_bounds = array<i64: 16, 32>}, {pipeline_mode = #tpu.pipeline_mode<synchronous>, transform_indices = @transform_3, window_bounds = array<i64: 4, 128>}, {pipeline_mode = #tpu.pipeline_mode<synchronous>, transform_indices = @transform_4, window_bounds = array<i64: 32, 128>}, {pipeline_mode = #tpu.pipeline_mode<synchronous>, transform_indices = @transform_5, window_bounds = array<i64: 1, 128>}, {pipeline_mode = #tpu.pipeline_mode<synchronous>, transform_indices = @transform_6, window_bounds = array<i64: 32, 128>}, {pipeline_mode = #tpu.pipeline_mode<synchronous>, transform_indices = @transform_7, window_bounds = array<i64: 1, 128>}, {pipeline_mode = #tpu.pipeline_mode<synchronous>, transform_indices = @transform_8, window_bounds = array<i64: 128, 128>}, {pipeline_mode = #tpu.pipeline_mode<synchronous>, transform_indices = @transform_9, window_bounds = array<i64: 1, 128>}, {pipeline_mode = #tpu.pipeline_mode<synchronous>, transform_indices = @transform_10, window_bounds = array<i64: 1, 128>}, {pipeline_mode = #tpu.pipeline_mode<synchronous>, transform_indices = @transform_11, window_bounds = array<i64: 1, 1>}, {transform_indices = @transform_12, window_bounds = array<i64: 16, 1>}]} {
    %c0 = arith.constant 0 : index
    %c0_0 = arith.constant 0 : index
    %c0_1 = arith.constant 0 : index
    %0 = vector.load %arg1[%c0, %c0_0, %c0_1] : memref<8x16x4xf32, #tpu.memory_space<vmem>>, vector<8x16x4xf32>
    %1 = vector.shape_cast %0 : vector<8x16x4xf32> to vector<128x4xf32>
    %c0_2 = arith.constant 0 : index
    %c0_3 = arith.constant 0 : index
    %2 = vector.load %arg2[%c0_2, %c0_3] : memref<16x32xf32, #tpu.memory_space<vmem>>, vector<16x32xf32>
    %c0_4 = arith.constant 0 : index
    %c0_5 = arith.constant 0 : index
    %3 = vector.load %arg3[%c0_4, %c0_5] : memref<16x32xf32, #tpu.memory_space<vmem>>, vector<16x32xf32>
    %c0_6 = arith.constant 0 : index
    %c0_7 = arith.constant 0 : index
    %4 = vector.load %arg4[%c0_6, %c0_7] : memref<4x128xf32, #tpu.memory_space<vmem>>, vector<4x128xf32>
    %c0_8 = arith.constant 0 : index
    %c0_9 = arith.constant 0 : index
    %5 = vector.load %arg5[%c0_8, %c0_9] : memref<32x128xf32, #tpu.memory_space<vmem>>, vector<32x128xf32>
    %c0_10 = arith.constant 0 : index
    %c0_11 = arith.constant 0 : index
    %6 = vector.load %arg6[%c0_10, %c0_11] : memref<1x128xf32, #tpu.memory_space<vmem>>, vector<1x128xf32>
    %c0_12 = arith.constant 0 : index
    %c0_13 = arith.constant 0 : index
    %7 = vector.load %arg7[%c0_12, %c0_13] : memref<32x128xf32, #tpu.memory_space<vmem>>, vector<32x128xf32>
    %c0_14 = arith.constant 0 : index
    %c0_15 = arith.constant 0 : index
    %8 = vector.load %arg8[%c0_14, %c0_15] : memref<1x128xf32, #tpu.memory_space<vmem>>, vector<1x128xf32>
    %c0_16 = arith.constant 0 : index
    %c0_17 = arith.constant 0 : index
    %9 = vector.load %arg9[%c0_16, %c0_17] : memref<128x128xf32, #tpu.memory_space<vmem>>, vector<128x128xf32>
    %c0_18 = arith.constant 0 : index
    %c0_19 = arith.constant 0 : index
    %10 = vector.load %arg10[%c0_18, %c0_19] : memref<1x128xf32, #tpu.memory_space<vmem>>, vector<1x128xf32>
    %c0_20 = arith.constant 0 : index
    %c0_21 = arith.constant 0 : index
    %11 = vector.load %arg11[%c0_20, %c0_21] : memref<1x128xf32, #tpu.memory_space<vmem>>, vector<1x128xf32>
    %c0_22 = arith.constant 0 : index
    %c0_23 = arith.constant 0 : index
    %12 = vector.load %arg12[%c0_22, %c0_23] : memref<1x1xf32, #tpu.memory_space<vmem>>, vector<1x1xf32>
    %cst = arith.constant dense<0.000000e+00> : vector<128x128xf32>
    %13 = tpu.matmul %1, %4, %cst {dimension_numbers = #tpu.dot_dimension_numbers<[1], [0], [0], [1], [0, 0, 1, 1], [], []>} : vector<128x4xf32>, vector<4x128xf32>, vector<128x128xf32> -> vector<128x128xf32>
    %14 = vector.broadcast %6 : vector<1x128xf32> to vector<128x128xf32>
    %15 = arith.addf %13, %14 : vector<128x128xf32>
    %16 = vector.shape_cast %15 : vector<128x128xf32> to vector<8x16x128xf32>
    %17 = vector.extract_strided_slice %16 {offsets = [0, 0, 0], sizes = [1, 16, 128], strides = [1, 1, 1]} : vector<8x16x128xf32> to vector<1x16x128xf32>
    %18 = vector.shape_cast %17 : vector<1x16x128xf32> to vector<16x128xf32>
    %cst_24 = arith.constant dense<0.000000e+00> : vector<16x128xf32>
    %19 = tpu.matmul %2, %5, %cst_24 {dimension_numbers = #tpu.dot_dimension_numbers<[1], [0], [0], [1], [0, 0, 1, 1], [], []>} : vector<16x32xf32>, vector<32x128xf32>, vector<16x128xf32> -> vector<16x128xf32>
    %20 = arith.addf %18, %19 : vector<16x128xf32>
    %21 = arith.negf %20 : vector<16x128xf32>
    %22 = math.exp %21 : vector<16x128xf32>
    %cst_25 = arith.constant 1.000000e+00 : f32
    %23 = vector.broadcast %cst_25 : f32 to vector<16x128xf32>
    %24 = arith.addf %23, %22 : vector<16x128xf32>
    %25 = arith.divf %23, %24 : vector<16x128xf32>
    %26 = vector.extract_strided_slice %20 {offsets = [0, 64], sizes = [16, 32], strides = [1, 1]} : vector<16x128xf32> to vector<16x32xf32>
    %27 = math.tanh %26 : vector<16x32xf32>
    %28 = vector.extract_strided_slice %25 {offsets = [0, 32], sizes = [16, 32], strides = [1, 1]} : vector<16x128xf32> to vector<16x32xf32>
    %29 = arith.mulf %28, %3 : vector<16x32xf32>
    %30 = vector.extract_strided_slice %25 {offsets = [0, 0], sizes = [16, 32], strides = [1, 1]} : vector<16x128xf32> to vector<16x32xf32>
    %31 = arith.mulf %30, %27 : vector<16x32xf32>
    %32 = arith.addf %29, %31 : vector<16x32xf32>
    %33 = vector.extract_strided_slice %25 {offsets = [0, 96], sizes = [16, 32], strides = [1, 1]} : vector<16x128xf32> to vector<16x32xf32>
    %34 = math.tanh %32 : vector<16x32xf32>
    %35 = arith.mulf %33, %34 : vector<16x32xf32>
    %36 = vector.extract_strided_slice %16 {offsets = [1, 0, 0], sizes = [1, 16, 128], strides = [1, 1, 1]} : vector<8x16x128xf32> to vector<1x16x128xf32>
    %37 = vector.shape_cast %36 : vector<1x16x128xf32> to vector<16x128xf32>
    %cst_26 = arith.constant dense<0.000000e+00> : vector<16x128xf32>
    %38 = tpu.matmul %35, %5, %cst_26 {dimension_numbers = #tpu.dot_dimension_numbers<[1], [0], [0], [1], [0, 0, 1, 1], [], []>} : vector<16x32xf32>, vector<32x128xf32>, vector<16x128xf32> -> vector<16x128xf32>
    %39 = arith.addf %37, %38 : vector<16x128xf32>
    %40 = arith.negf %39 : vector<16x128xf32>
    %41 = math.exp %40 : vector<16x128xf32>
    %cst_27 = arith.constant 1.000000e+00 : f32
    %42 = vector.broadcast %cst_27 : f32 to vector<16x128xf32>
    %43 = arith.addf %42, %41 : vector<16x128xf32>
    %44 = arith.divf %42, %43 : vector<16x128xf32>
    %45 = vector.extract_strided_slice %39 {offsets = [0, 64], sizes = [16, 32], strides = [1, 1]} : vector<16x128xf32> to vector<16x32xf32>
    %46 = math.tanh %45 : vector<16x32xf32>
    %47 = vector.extract_strided_slice %44 {offsets = [0, 32], sizes = [16, 32], strides = [1, 1]} : vector<16x128xf32> to vector<16x32xf32>
    %48 = arith.mulf %47, %32 : vector<16x32xf32>
    %49 = vector.extract_strided_slice %44 {offsets = [0, 0], sizes = [16, 32], strides = [1, 1]} : vector<16x128xf32> to vector<16x32xf32>
    %50 = arith.mulf %49, %46 : vector<16x32xf32>
    %51 = arith.addf %48, %50 : vector<16x32xf32>
    %52 = vector.extract_strided_slice %44 {offsets = [0, 96], sizes = [16, 32], strides = [1, 1]} : vector<16x128xf32> to vector<16x32xf32>
    %53 = math.tanh %51 : vector<16x32xf32>
    %54 = arith.mulf %52, %53 : vector<16x32xf32>
    %55 = vector.extract_strided_slice %16 {offsets = [2, 0, 0], sizes = [1, 16, 128], strides = [1, 1, 1]} : vector<8x16x128xf32> to vector<1x16x128xf32>
    %56 = vector.shape_cast %55 : vector<1x16x128xf32> to vector<16x128xf32>
    %cst_28 = arith.constant dense<0.000000e+00> : vector<16x128xf32>
    %57 = tpu.matmul %54, %5, %cst_28 {dimension_numbers = #tpu.dot_dimension_numbers<[1], [0], [0], [1], [0, 0, 1, 1], [], []>} : vector<16x32xf32>, vector<32x128xf32>, vector<16x128xf32> -> vector<16x128xf32>
    %58 = arith.addf %56, %57 : vector<16x128xf32>
    %59 = arith.negf %58 : vector<16x128xf32>
    %60 = math.exp %59 : vector<16x128xf32>
    %cst_29 = arith.constant 1.000000e+00 : f32
    %61 = vector.broadcast %cst_29 : f32 to vector<16x128xf32>
    %62 = arith.addf %61, %60 : vector<16x128xf32>
    %63 = arith.divf %61, %62 : vector<16x128xf32>
    %64 = vector.extract_strided_slice %58 {offsets = [0, 64], sizes = [16, 32], strides = [1, 1]} : vector<16x128xf32> to vector<16x32xf32>
    %65 = math.tanh %64 : vector<16x32xf32>
    %66 = vector.extract_strided_slice %63 {offsets = [0, 32], sizes = [16, 32], strides = [1, 1]} : vector<16x128xf32> to vector<16x32xf32>
    %67 = arith.mulf %66, %51 : vector<16x32xf32>
    %68 = vector.extract_strided_slice %63 {offsets = [0, 0], sizes = [16, 32], strides = [1, 1]} : vector<16x128xf32> to vector<16x32xf32>
    %69 = arith.mulf %68, %65 : vector<16x32xf32>
    %70 = arith.addf %67, %69 : vector<16x32xf32>
    %71 = vector.extract_strided_slice %63 {offsets = [0, 96], sizes = [16, 32], strides = [1, 1]} : vector<16x128xf32> to vector<16x32xf32>
    %72 = math.tanh %70 : vector<16x32xf32>
    %73 = arith.mulf %71, %72 : vector<16x32xf32>
    %74 = vector.extract_strided_slice %16 {offsets = [3, 0, 0], sizes = [1, 16, 128], strides = [1, 1, 1]} : vector<8x16x128xf32> to vector<1x16x128xf32>
    %75 = vector.shape_cast %74 : vector<1x16x128xf32> to vector<16x128xf32>
    %cst_30 = arith.constant dense<0.000000e+00> : vector<16x128xf32>
    %76 = tpu.matmul %73, %5, %cst_30 {dimension_numbers = #tpu.dot_dimension_numbers<[1], [0], [0], [1], [0, 0, 1, 1], [], []>} : vector<16x32xf32>, vector<32x128xf32>, vector<16x128xf32> -> vector<16x128xf32>
    %77 = arith.addf %75, %76 : vector<16x128xf32>
    %78 = arith.negf %77 : vector<16x128xf32>
    %79 = math.exp %78 : vector<16x128xf32>
    %cst_31 = arith.constant 1.000000e+00 : f32
    %80 = vector.broadcast %cst_31 : f32 to vector<16x128xf32>
    %81 = arith.addf %80, %79 : vector<16x128xf32>
    %82 = arith.divf %80, %81 : vector<16x128xf32>
    %83 = vector.extract_strided_slice %77 {offsets = [0, 64], sizes = [16, 32], strides = [1, 1]} : vector<16x128xf32> to vector<16x32xf32>
    %84 = math.tanh %83 : vector<16x32xf32>
    %85 = vector.extract_strided_slice %82 {offsets = [0, 32], sizes = [16, 32], strides = [1, 1]} : vector<16x128xf32> to vector<16x32xf32>
    %86 = arith.mulf %85, %70 : vector<16x32xf32>
    %87 = vector.extract_strided_slice %82 {offsets = [0, 0], sizes = [16, 32], strides = [1, 1]} : vector<16x128xf32> to vector<16x32xf32>
    %88 = arith.mulf %87, %84 : vector<16x32xf32>
    %89 = arith.addf %86, %88 : vector<16x32xf32>
    %90 = vector.extract_strided_slice %82 {offsets = [0, 96], sizes = [16, 32], strides = [1, 1]} : vector<16x128xf32> to vector<16x32xf32>
    %91 = math.tanh %89 : vector<16x32xf32>
    %92 = arith.mulf %90, %91 : vector<16x32xf32>
    %93 = vector.extract_strided_slice %16 {offsets = [4, 0, 0], sizes = [1, 16, 128], strides = [1, 1, 1]} : vector<8x16x128xf32> to vector<1x16x128xf32>
    %94 = vector.shape_cast %93 : vector<1x16x128xf32> to vector<16x128xf32>
    %cst_32 = arith.constant dense<0.000000e+00> : vector<16x128xf32>
    %95 = tpu.matmul %92, %5, %cst_32 {dimension_numbers = #tpu.dot_dimension_numbers<[1], [0], [0], [1], [0, 0, 1, 1], [], []>} : vector<16x32xf32>, vector<32x128xf32>, vector<16x128xf32> -> vector<16x128xf32>
    %96 = arith.addf %94, %95 : vector<16x128xf32>
    %97 = arith.negf %96 : vector<16x128xf32>
    %98 = math.exp %97 : vector<16x128xf32>
    %cst_33 = arith.constant 1.000000e+00 : f32
    %99 = vector.broadcast %cst_33 : f32 to vector<16x128xf32>
    %100 = arith.addf %99, %98 : vector<16x128xf32>
    %101 = arith.divf %99, %100 : vector<16x128xf32>
    %102 = vector.extract_strided_slice %96 {offsets = [0, 64], sizes = [16, 32], strides = [1, 1]} : vector<16x128xf32> to vector<16x32xf32>
    %103 = math.tanh %102 : vector<16x32xf32>
    %104 = vector.extract_strided_slice %101 {offsets = [0, 32], sizes = [16, 32], strides = [1, 1]} : vector<16x128xf32> to vector<16x32xf32>
    %105 = arith.mulf %104, %89 : vector<16x32xf32>
    %106 = vector.extract_strided_slice %101 {offsets = [0, 0], sizes = [16, 32], strides = [1, 1]} : vector<16x128xf32> to vector<16x32xf32>
    %107 = arith.mulf %106, %103 : vector<16x32xf32>
    %108 = arith.addf %105, %107 : vector<16x32xf32>
    %109 = vector.extract_strided_slice %101 {offsets = [0, 96], sizes = [16, 32], strides = [1, 1]} : vector<16x128xf32> to vector<16x32xf32>
    %110 = math.tanh %108 : vector<16x32xf32>
    %111 = arith.mulf %109, %110 : vector<16x32xf32>
    %112 = vector.extract_strided_slice %16 {offsets = [5, 0, 0], sizes = [1, 16, 128], strides = [1, 1, 1]} : vector<8x16x128xf32> to vector<1x16x128xf32>
    %113 = vector.shape_cast %112 : vector<1x16x128xf32> to vector<16x128xf32>
    %cst_34 = arith.constant dense<0.000000e+00> : vector<16x128xf32>
    %114 = tpu.matmul %111, %5, %cst_34 {dimension_numbers = #tpu.dot_dimension_numbers<[1], [0], [0], [1], [0, 0, 1, 1], [], []>} : vector<16x32xf32>, vector<32x128xf32>, vector<16x128xf32> -> vector<16x128xf32>
    %115 = arith.addf %113, %114 : vector<16x128xf32>
    %116 = arith.negf %115 : vector<16x128xf32>
    %117 = math.exp %116 : vector<16x128xf32>
    %cst_35 = arith.constant 1.000000e+00 : f32
    %118 = vector.broadcast %cst_35 : f32 to vector<16x128xf32>
    %119 = arith.addf %118, %117 : vector<16x128xf32>
    %120 = arith.divf %118, %119 : vector<16x128xf32>
    %121 = vector.extract_strided_slice %115 {offsets = [0, 64], sizes = [16, 32], strides = [1, 1]} : vector<16x128xf32> to vector<16x32xf32>
    %122 = math.tanh %121 : vector<16x32xf32>
    %123 = vector.extract_strided_slice %120 {offsets = [0, 32], sizes = [16, 32], strides = [1, 1]} : vector<16x128xf32> to vector<16x32xf32>
    %124 = arith.mulf %123, %108 : vector<16x32xf32>
    %125 = vector.extract_strided_slice %120 {offsets = [0, 0], sizes = [16, 32], strides = [1, 1]} : vector<16x128xf32> to vector<16x32xf32>
    %126 = arith.mulf %125, %122 : vector<16x32xf32>
    %127 = arith.addf %124, %126 : vector<16x32xf32>
    %128 = vector.extract_strided_slice %120 {offsets = [0, 96], sizes = [16, 32], strides = [1, 1]} : vector<16x128xf32> to vector<16x32xf32>
    %129 = math.tanh %127 : vector<16x32xf32>
    %130 = arith.mulf %128, %129 : vector<16x32xf32>
    %131 = vector.extract_strided_slice %16 {offsets = [6, 0, 0], sizes = [1, 16, 128], strides = [1, 1, 1]} : vector<8x16x128xf32> to vector<1x16x128xf32>
    %132 = vector.shape_cast %131 : vector<1x16x128xf32> to vector<16x128xf32>
    %cst_36 = arith.constant dense<0.000000e+00> : vector<16x128xf32>
    %133 = tpu.matmul %130, %5, %cst_36 {dimension_numbers = #tpu.dot_dimension_numbers<[1], [0], [0], [1], [0, 0, 1, 1], [], []>} : vector<16x32xf32>, vector<32x128xf32>, vector<16x128xf32> -> vector<16x128xf32>
    %134 = arith.addf %132, %133 : vector<16x128xf32>
    %135 = arith.negf %134 : vector<16x128xf32>
    %136 = math.exp %135 : vector<16x128xf32>
    %cst_37 = arith.constant 1.000000e+00 : f32
    %137 = vector.broadcast %cst_37 : f32 to vector<16x128xf32>
    %138 = arith.addf %137, %136 : vector<16x128xf32>
    %139 = arith.divf %137, %138 : vector<16x128xf32>
    %140 = vector.extract_strided_slice %134 {offsets = [0, 64], sizes = [16, 32], strides = [1, 1]} : vector<16x128xf32> to vector<16x32xf32>
    %141 = math.tanh %140 : vector<16x32xf32>
    %142 = vector.extract_strided_slice %139 {offsets = [0, 32], sizes = [16, 32], strides = [1, 1]} : vector<16x128xf32> to vector<16x32xf32>
    %143 = arith.mulf %142, %127 : vector<16x32xf32>
    %144 = vector.extract_strided_slice %139 {offsets = [0, 0], sizes = [16, 32], strides = [1, 1]} : vector<16x128xf32> to vector<16x32xf32>
    %145 = arith.mulf %144, %141 : vector<16x32xf32>
    %146 = arith.addf %143, %145 : vector<16x32xf32>
    %147 = vector.extract_strided_slice %139 {offsets = [0, 96], sizes = [16, 32], strides = [1, 1]} : vector<16x128xf32> to vector<16x32xf32>
    %148 = math.tanh %146 : vector<16x32xf32>
    %149 = arith.mulf %147, %148 : vector<16x32xf32>
    %150 = vector.extract_strided_slice %16 {offsets = [7, 0, 0], sizes = [1, 16, 128], strides = [1, 1, 1]} : vector<8x16x128xf32> to vector<1x16x128xf32>
    %151 = vector.shape_cast %150 : vector<1x16x128xf32> to vector<16x128xf32>
    %cst_38 = arith.constant dense<0.000000e+00> : vector<16x128xf32>
    %152 = tpu.matmul %149, %5, %cst_38 {dimension_numbers = #tpu.dot_dimension_numbers<[1], [0], [0], [1], [0, 0, 1, 1], [], []>} : vector<16x32xf32>, vector<32x128xf32>, vector<16x128xf32> -> vector<16x128xf32>
    %153 = arith.addf %151, %152 : vector<16x128xf32>
    %154 = arith.negf %153 : vector<16x128xf32>
    %155 = math.exp %154 : vector<16x128xf32>
    %cst_39 = arith.constant 1.000000e+00 : f32
    %156 = vector.broadcast %cst_39 : f32 to vector<16x128xf32>
    %157 = arith.addf %156, %155 : vector<16x128xf32>
    %158 = arith.divf %156, %157 : vector<16x128xf32>
    %159 = vector.extract_strided_slice %153 {offsets = [0, 64], sizes = [16, 32], strides = [1, 1]} : vector<16x128xf32> to vector<16x32xf32>
    %160 = math.tanh %159 : vector<16x32xf32>
    %161 = vector.extract_strided_slice %158 {offsets = [0, 32], sizes = [16, 32], strides = [1, 1]} : vector<16x128xf32> to vector<16x32xf32>
    %162 = arith.mulf %161, %146 : vector<16x32xf32>
    %163 = vector.extract_strided_slice %158 {offsets = [0, 0], sizes = [16, 32], strides = [1, 1]} : vector<16x128xf32> to vector<16x32xf32>
    %164 = arith.mulf %163, %160 : vector<16x32xf32>
    %165 = arith.addf %162, %164 : vector<16x32xf32>
    %166 = vector.extract_strided_slice %158 {offsets = [0, 96], sizes = [16, 32], strides = [1, 1]} : vector<16x128xf32> to vector<16x32xf32>
    %167 = math.tanh %165 : vector<16x32xf32>
    %168 = arith.mulf %166, %167 : vector<16x32xf32>
    %cst_40 = arith.constant 0.000000e+00 : f32
    %169 = vector.broadcast %cst_40 : f32 to vector<16x32xf32>
    %170 = arith.maximumf %168, %169 : vector<16x32xf32>
    %cst_41 = arith.constant dense<0.000000e+00> : vector<16x128xf32>
    %171 = tpu.matmul %170, %7, %cst_41 {dimension_numbers = #tpu.dot_dimension_numbers<[1], [0], [0], [1], [0, 0, 1, 1], [], []>} : vector<16x32xf32>, vector<32x128xf32>, vector<16x128xf32> -> vector<16x128xf32>
    %172 = vector.broadcast %8 : vector<1x128xf32> to vector<16x128xf32>
    %173 = arith.addf %171, %172 : vector<16x128xf32>
    %cst_42 = arith.constant 0.000000e+00 : f32
    %174 = vector.broadcast %cst_42 : f32 to vector<16x128xf32>
    %175 = arith.maximumf %173, %174 : vector<16x128xf32>
    %cst_43 = arith.constant dense<0.000000e+00> : vector<16x128xf32>
    %176 = tpu.matmul %175, %9, %cst_43 {dimension_numbers = #tpu.dot_dimension_numbers<[1], [0], [0], [1], [0, 0, 1, 1], [], []>} : vector<16x128xf32>, vector<128x128xf32>, vector<16x128xf32> -> vector<16x128xf32>
    %177 = vector.broadcast %10 : vector<1x128xf32> to vector<16x128xf32>
    %178 = arith.addf %176, %177 : vector<16x128xf32>
    %cst_44 = arith.constant 0.000000e+00 : f32
    %179 = vector.broadcast %cst_44 : f32 to vector<16x128xf32>
    %180 = arith.maximumf %178, %179 : vector<16x128xf32>
    %181 = vector.broadcast %11 : vector<1x128xf32> to vector<16x128xf32>
    %182 = arith.mulf %180, %181 : vector<16x128xf32>
    %cst_45 = arith.constant dense<0.000000e+00> : vector<16xf32>
    %183 = vector.multi_reduction <add>, %182, %cst_45 [1] : vector<16x128xf32> to vector<16xf32>
    %184 = vector.shape_cast %183 : vector<16xf32> to vector<16x1xf32>
    %185 = vector.broadcast %12 : vector<1x1xf32> to vector<16x1xf32>
    %186 = arith.addf %184, %185 : vector<16x1xf32>
    %c0_46 = arith.constant 0 : index
    %c0_47 = arith.constant 0 : index
    %187 = vector.load %arg13[%c0_46, %c0_47] : memref<16x1xf32, #tpu.memory_space<vmem>>, vector<16x1xf32>
    tpu.vector_store %arg13[%c0_46, %c0_47], %186 {strides = array<i32>} : memref<16x1xf32, #tpu.memory_space<vmem>>, vector<16x1xf32>,
    return
  }
  func.func @transform_0(%arg0: i32) -> (i32, i32, i32) {
    %c0_i32 = arith.constant 0 : i32
    %c0_i32_0 = arith.constant 0 : i32
    %c0_i32_1 = arith.constant 0 : i32
    return %c0_i32, %arg0, %c0_i32_0 : i32, i32, i32
  }
  func.func @transform_1(%arg0: i32) -> (i32, i32) {
    %c0_i32 = arith.constant 0 : i32
    %c0_i32_0 = arith.constant 0 : i32
    return %arg0, %c0_i32 : i32, i32
  }
  func.func @transform_2(%arg0: i32) -> (i32, i32) {
    %c0_i32 = arith.constant 0 : i32
    %c0_i32_0 = arith.constant 0 : i32
    return %arg0, %c0_i32 : i32, i32
  }
  func.func @transform_3(%arg0: i32) -> (i32, i32) {
    %c0_i32 = arith.constant 0 : i32
    %c0_i32_0 = arith.constant 0 : i32
    %c0_i32_1 = arith.constant 0 : i32
    return %c0_i32, %c0_i32_0 : i32, i32
  }
  func.func @transform_4(%arg0: i32) -> (i32, i32) {
    %c0_i32 = arith.constant 0 : i32
    %c0_i32_0 = arith.constant 0 : i32
    %c0_i32_1 = arith.constant 0 : i32
    return %c0_i32, %c0_i32_0 : i32, i32
  }
  func.func @transform_5(%arg0: i32) -> (i32, i32) {
    %c0_i32 = arith.constant 0 : i32
    %c0_i32_0 = arith.constant 0 : i32
    %c0_i32_1 = arith.constant 0 : i32
    return %c0_i32, %c0_i32_0 : i32, i32
  }
  func.func @transform_6(%arg0: i32) -> (i32, i32) {
    %c0_i32 = arith.constant 0 : i32
    %c0_i32_0 = arith.constant 0 : i32
    %c0_i32_1 = arith.constant 0 : i32
    return %c0_i32, %c0_i32_0 : i32, i32
  }
  func.func @transform_7(%arg0: i32) -> (i32, i32) {
    %c0_i32 = arith.constant 0 : i32
    %c0_i32_0 = arith.constant 0 : i32
    %c0_i32_1 = arith.constant 0 : i32
    return %c0_i32, %c0_i32_0 : i32, i32
  }
  func.func @transform_8(%arg0: i32) -> (i32, i32) {
    %c0_i32 = arith.constant 0 : i32
    %c0_i32_0 = arith.constant 0 : i32
    %c0_i32_1 = arith.constant 0 : i32
    return %c0_i32, %c0_i32_0 : i32, i32
  }
  func.func @transform_9(%arg0: i32) -> (i32, i32) {
    %c0_i32 = arith.constant 0 : i32
    %c0_i32_0 = arith.constant 0 : i32
    %c0_i32_1 = arith.constant 0 : i32
    return %c0_i32, %c0_i32_0 : i32, i32
  }
  func.func @transform_10(%arg0: i32) -> (i32, i32) {
    %c0_i32 = arith.constant 0 : i32
    %c0_i32_0 = arith.constant 0 : i32
    %c0_i32_1 = arith.constant 0 : i32
    return %c0_i32, %c0_i32_0 : i32, i32
  }
  func.func @transform_11(%arg0: i32) -> (i32, i32) {
    %c0_i32 = arith.constant 0 : i32
    %c0_i32_0 = arith.constant 0 : i32
    %c0_i32_1 = arith.constant 0 : i32
    return %c0_i32, %c0_i32_0 : i32, i32
  }
  func.func @transform_12(%arg0: i32) -> (i32, i32) {
    %c0_i32 = arith.constant 0 : i32
    %c0_i32_0 = arith.constant 0 : i32
    return %arg0, %c0_i32 : i32, i32
  }
}

</mosaic_0001>

<llo_original>
// kernel: decoder_forward.1
$region0: #{decoder_forward.1}
  #allocation0 [shape = 'u32[]', space=smem, size = 0x4, offset = 0x4, fixed_abs, tag = 'smem constant byte address 0x4 - core index']
  #allocation1 [shape = 'u32[144,128]{1,0:T(1,128)}', space=vmem, size = 0x12000, scoped, tag = 'internal scratch']
  #allocation2 [shape = 'f32[1,1]{1,0:T(1,128)S(1)}', space=vmem, size = 0x200, scoped, tag = 'scoped memory for decoder_forward.1']
  %s0 = inlined_call_operand.vmem [shape: f32[8,16,4], index: 0, kind: input, shape index: {}]
  %s1 = inlined_call_operand.vmem [shape: f32[16,32], index: 1, kind: input, shape index: {}]
  %s2 = inlined_call_operand.vmem [shape: f32[16,32], index: 2, kind: input, shape index: {}]
  %s3 = inlined_call_operand.vmem [shape: f32[4,128], index: 3, kind: input, shape index: {}]
  %s4 = inlined_call_operand.vmem [shape: f32[32,128], index: 4, kind: input, shape index: {}]
  %s5 = inlined_call_operand.vmem [shape: f32[1,128], index: 5, kind: input, shape index: {}]
  %s6 = inlined_call_operand.vmem [shape: f32[32,128], index: 6, kind: input, shape index: {}]
  %s7 = inlined_call_operand.vmem [shape: f32[1,128], index: 7, kind: input, shape index: {}]
  %s8 = inlined_call_operand.vmem [shape: f32[128,128], index: 8, kind: input, shape index: {}]
  %s9 = inlined_call_operand.vmem [shape: f32[1,128], index: 9, kind: input, shape index: {}]
  %s10 = inlined_call_operand.vmem [shape: f32[1,128], index: 10, kind: input, shape index: {}]
  %s11 = inlined_call_operand.<no memory space> [shape: f32[1,1], index: 11, kind: input, shape index: {}]
  %s12 = inlined_call_operand.vmem [shape: f32[16,1], index: 12, kind: output, shape index: {}]
  %s13 = sld [smem:[#allocation0]]
  $region58: #{decoder_forward.1} parent=0
    _
  %s15 = ssub.s32 1, %s13
  %s16 = scalar_select 0, %s15, %s13
  %v17 = vstv %s11
  %18 = vst [vmem:[#allocation2] sm:$0x1] %v17
  // Predicated region
  $region2: #{decoder_forward.1} parent=0 // pred_check
    _
  $region3: #{decoder_forward.1} parent=0 // pred_check_branch
    %20 = sbr.rel (0) target = $region5
  $region4: #{decoder_forward.1} parent=0 // pred_region
    _
  $region5: #{decoder_forward.1} parent=0 // pred_fallthru
    _
  // Predicated region
  $region6: #{decoder_forward.1} parent=0 // pred_check
    _
  $region7: #{decoder_forward.1} parent=0 // pred_check_branch
    %22 = sbr.rel (0) target = $region9
  $region8: #{decoder_forward.1} parent=0 // pred_region
    _
  $region9: #{decoder_forward.1} parent=0 // pred_fallthru
    _
  // Predicated region
  $region10: #{decoder_forward.1} parent=0 // pred_check
    _
  $region11: #{decoder_forward.1} parent=0 // pred_check_branch
    %24 = sbr.rel (0) target = $region13
  $region12: #{decoder_forward.1} parent=0 // pred_region
    _
  $region13: #{decoder_forward.1} parent=0 // pred_fallthru
    _
  // Predicated region
  $region14: #{decoder_forward.1} parent=0 // pred_check
    _
  $region15: #{decoder_forward.1} parent=0 // pred_check_branch
    %26 = sbr.rel (0) target = $region17
  $region16: #{decoder_forward.1} parent=0 // pred_region
    _
  $region17: #{decoder_forward.1} parent=0 // pred_fallthru
    _
  // Predicated region
  $region18: #{decoder_forward.1} parent=0 // pred_check
    _
  $region19: #{decoder_forward.1} parent=0 // pred_check_branch
    %28 = sbr.rel (0) target = $region21
  $region20: #{decoder_forward.1} parent=0 // pred_region
    _
  $region21: #{decoder_forward.1} parent=0 // pred_fallthru
    _
  // Predicated region
  $region22: #{decoder_forward.1} parent=0 // pred_check
    _
  $region23: #{decoder_forward.1} parent=0 // pred_check_branch
    %30 = sbr.rel (0) target = $region25
  $region24: #{decoder_forward.1} parent=0 // pred_region
    _
  $region25: #{decoder_forward.1} parent=0 // pred_fallthru
    _
  // Predicated region
  $region26: #{decoder_forward.1} parent=0 // pred_check
    _
  $region27: #{decoder_forward.1} parent=0 // pred_check_branch
    %32 = sbr.rel (0) target = $region29
  $region28: #{decoder_forward.1} parent=0 // pred_region
    _
  $region29: #{decoder_forward.1} parent=0 // pred_fallthru
    _
  // Predicated region
  $region30: #{decoder_forward.1} parent=0 // pred_check
    _
  $region31: #{decoder_forward.1} parent=0 // pred_check_branch
    %34 = sbr.rel (0) target = $region33
  $region32: #{decoder_forward.1} parent=0 // pred_region
    _
  $region33: #{decoder_forward.1} parent=0 // pred_fallthru
    _
  // Predicated region
  $region34: #{decoder_forward.1} parent=0 // pred_check
    _
  $region35: #{decoder_forward.1} parent=0 // pred_check_branch
    %36 = sbr.rel (0) target = $region37
  $region36: #{decoder_forward.1} parent=0 // pred_region
    _
  $region37: #{decoder_forward.1} parent=0 // pred_fallthru
    _
  // Predicated region
  $region38: #{decoder_forward.1} parent=0 // pred_check
    _
  $region39: #{decoder_forward.1} parent=0 // pred_check_branch
    %38 = sbr.rel (0) target = $region41
  $region40: #{decoder_forward.1} parent=0 // pred_region
    _
  $region41: #{decoder_forward.1} parent=0 // pred_fallthru
    _
  // Predicated region
  $region42: #{decoder_forward.1} parent=0 // pred_check
    _
  $region43: #{decoder_forward.1} parent=0 // pred_check_branch
    %40 = sbr.rel (0) target = $region45
  $region44: #{decoder_forward.1} parent=0 // pred_region
    _
  $region45: #{decoder_forward.1} parent=0 // pred_fallthru
    _
  // Predicated region
  $region46: #{decoder_forward.1} parent=0 // pred_check
    _
  $region47: #{decoder_forward.1} parent=0 // pred_check_branch
    %42 = sbr.rel (0) target = $region49
  $region48: #{decoder_forward.1} parent=0 // pred_region
    _
  $region49: #{decoder_forward.1} parent=0 // pred_fallthru
    _
  %v43 = vld [vmem:[%s0] sm:$0xff]
  %v44 = vld [vmem:[%s0 + $0x8] sm:$0xff]
  %v45 = vld [vmem:[%s0 + $0x10] sm:$0xff]
  %v46 = vld [vmem:[%s0 + $0x18] sm:$0xff]
  %v47 = vld [vmem:[%s0 + $0x20] sm:$0xff]
  %v48 = vld [vmem:[%s0 + $0x28] sm:$0xff]
  %v49 = vld [vmem:[%s0 + $0x30] sm:$0xff]
  %v50 = vld [vmem:[%s0 + $0x38] sm:$0xff]
  %v51 = vld [vmem:[%s0 + $0x40] sm:$0xff]
  %v52 = vld [vmem:[%s0 + $0x48] sm:$0xff]
  %v53 = vld [vmem:[%s0 + $0x50] sm:$0xff]
  %v54 = vld [vmem:[%s0 + $0x58] sm:$0xff]
  %v55 = vld [vmem:[%s0 + $0x60] sm:$0xff]
  %v56 = vld [vmem:[%s0 + $0x68] sm:$0xff]
  %v57 = vld [vmem:[%s0 + $0x70] sm:$0xff]
  %v58 = vld [vmem:[%s0 + $0x78] sm:$0xff]
  %v59 = vld [vmem:[%s1] sm:$0xff]
  %v60 = vld [vmem:[%s1 + $0x8] sm:$0xff]
  %v61 = vld [vmem:[%s2] sm:$0xff]
  %v62 = vld [vmem:[%s2 + $0x8] sm:$0xff]
  %v63 = vld [vmem:[%s3] sm:$0xf]
  %v64 = vld [vmem:[%s4] sm:$0xff]
  %v65 = vld [vmem:[%s4 + $0x8] sm:$0xff]
  %v66 = vld [vmem:[%s4 + $0x10] sm:$0xff]
  %v67 = vld [vmem:[%s4 + $0x18] sm:$0xff]
  %v68 = vld [vmem:[%s5] sm:$0x1]
  %v69 = vld [vmem:[%s6] sm:$0xff]
  %v70 = vld [vmem:[%s6 + $0x8] sm:$0xff]
  %v71 = vld [vmem:[%s6 + $0x10] sm:$0xff]
  %v72 = vld [vmem:[%s6 + $0x18] sm:$0xff]
  %v73 = vld [vmem:[%s7] sm:$0x1]
  %v74 = vld [vmem:[%s8] sm:$0xff]
  %v75 = vld [vmem:[%s8 + $0x8] sm:$0xff]
  %v76 = vld [vmem:[%s8 + $0x10] sm:$0xff]
  %v77 = vld [vmem:[%s8 + $0x18] sm:$0xff]
  %v78 = vld [vmem:[%s8 + $0x20] sm:$0xff]
  %v79 = vld [vmem:[%s8 + $0x28] sm:$0xff]
  %v80 = vld [vmem:[%s8 + $0x30] sm:$0xff]
  %v81 = vld [vmem:[%s8 + $0x38] sm:$0xff]
  %v82 = vld [vmem:[%s8 + $0x40] sm:$0xff]
  %v83 = vld [vmem:[%s8 + $0x48] sm:$0xff]
  %v84 = vld [vmem:[%s8 + $0x50] sm:$0xff]
  %v85 = vld [vmem:[%s8 + $0x58] sm:$0xff]
  %v86 = vld [vmem:[%s8 + $0x60] sm:$0xff]
  %v87 = vld [vmem:[%s8 + $0x68] sm:$0xff]
  %v88 = vld [vmem:[%s8 + $0x70] sm:$0xff]
  %v89 = vld [vmem:[%s8 + $0x78] sm:$0xff]
  %v90 = vld [vmem:[%s9] sm:$0x1]
  %v91 = vld [vmem:[%s10] sm:$0x1]
  %v92 = vld [vmem:[#allocation2] sm:$0x1]
  %v94 = vlaneseq
  %v95 = vshrl.u32 %v94, 7
  %v96 = vsub.s32 0, %v95
  %v97 = vrot.slane %v68, %v96
  %vm99 = vcmask 31744
  %v101 = vsel %vm99, %v43, 0
  %v104 = vsel %vm99, %v44, 0
  %v107 = vsel %vm99, %v45, 0
  %v110 = vsel %vm99, %v46, 0
  %v113 = vsel %vm99, %v47, 0
  %v116 = vsel %vm99, %v48, 0
  %v119 = vsel %vm99, %v49, 0
  %v122 = vsel %vm99, %v50, 0
  %v125 = vsel %vm99, %v51, 0
  %v128 = vsel %vm99, %v52, 0
  %v131 = vsel %vm99, %v53, 0
  %v134 = vsel %vm99, %v54, 0
  %v137 = vsel %vm99, %v55, 0
  %v140 = vsel %vm99, %v56, 0
  %v143 = vsel %vm99, %v57, 0
  %v146 = vsel %vm99, %v58, 0
  %vm148 = vcmask 1043456
  %v150 = vsel %vm148, %v63, 0
  %152 = vmatprep.subr.mxu0 0.0
  %153 = vmatpush1.msra.mxu0 %v150
  %154 = vmatprep.subr.mxu0 0.0
  %155 = vmatpush1.msra.mxu0 0.0
  %156 = vmatprep.subr.mxu0 0.0
  %157 = vmatpush1.msra.mxu0 0.0
  %158 = vmatprep.subr.mxu0 0.0
  %159 = vmatpush1.msra.mxu0 0.0
  %160 = vmatprep.subr.mxu0 0.0
  %161 = vmatpush1.msra.mxu0 0.0
  %162 = vmatprep.subr.mxu0 0.0
  %163 = vmatpush1.msra.mxu0 0.0
  %164 = vmatprep.subr.mxu0 0.0
  %165 = vmatpush1.msra.mxu0 0.0
  %166 = vmatprep.subr.mxu0 0.0
  %167 = vmatpush1.msra.mxu0 0.0
  %168 = vmatprep.subr.mxu0 0.0
  %169 = vmatpush1.msra.mxu0 0.0
  %170 = vmatprep.subr.mxu0 0.0
  %171 = vmatpush1.msra.mxu0 0.0
  %172 = vmatprep.subr.mxu0 0.0
  %173 = vmatpush1.msra.mxu0 0.0
  %174 = vmatprep.subr.mxu0 0.0
  %175 = vmatpush1.msra.mxu0 0.0
  %176 = vmatprep.subr.mxu0 0.0
  %177 = vmatpush1.msra.mxu0 0.0
  %178 = vmatprep.subr.mxu0 0.0
  %179 = vmatpush1.msra.mxu0 0.0
  %180 = vmatprep.subr.mxu0 0.0
  %181 = vmatpush1.msra.mxu0 0.0
  %182 = vmatprep.subr.mxu0 0.0
  %183 = vmatpush1.msra.mxu0 0.0
  %184 = vmatprep.subr.mxu0 0.0
  %185 = vmatpush1.msra.mxu0 0.0
  %186 = vmatprep.subr.mxu0 0.0
  %187 = vmatpush1.msra.mxu0 0.0
  %188 = vmatprep.subr.mxu0 0.0
  %189 = vmatpush1.msra.mxu0 0.0
  %190 = vmatprep.subr.mxu0 0.0
  %191 = vmatpush1.msra.mxu0 0.0
  %192 = vmatprep.subr.mxu0 0.0
  %193 = vmatpush1.msra.mxu0 0.0
  %194 = vmatprep.subr.mxu0 0.0
  %195 = vmatpush1.msra.mxu0 0.0
  %196 = vmatprep.subr.mxu0 0.0
  %197 = vmatpush1.msra.mxu0 0.0
  %198 = vmatprep.subr.mxu0 0.0
  %199 = vmatpush1.msra.mxu0 0.0
  %200 = vmatprep.subr.mxu0 0.0
  %201 = vmatpush1.msra.mxu0 0.0
  %202 = vmatprep.subr.mxu0 0.0
  %203 = vmatpush1.msra.mxu0 0.0
  %204 = vmatprep.subr.mxu0 0.0
  %205 = vmatpush1.msra.mxu0 0.0
  %206 = vmatprep.subr.mxu0 0.0
  %207 = vmatpush1.msra.mxu0 0.0
  %208 = vmatprep.subr.mxu0 0.0
  %209 = vmatpush1.msra.mxu0 0.0
  %210 = vmatprep.subr.mxu0 0.0
  %211 = vmatpush1.msra.mxu0 0.0
  %212 = vmatprep.subr.mxu0 0.0
  %213 = vmatpush1.msra.mxu0 0.0
  %214 = vmatprep.subr.mxu0 0.0
  %215 = vmatpush1.msra.mxu0 0.0
  %216 = vmatprep.mubr.f32.mxu0 0.0
  %217 = vmatmul.mubr.f32.gmra.mrb[0].mxu0 %v101
  %v218 = vpop.f32.mrb[0].mxu0
  %v219 = vadd.f32 %v97, %v218
  %v220 = vpop.f32.mrb[0].mxu0
  %221 = vmatprep.mubr.f32.mxu0 0.0
  %222 = vmatmul.mubr.f32.gmra.mrb[0].mxu0 %v104
  %v223 = vpop.f32.mrb[0].mxu0
  %v224 = vadd.f32 %v97, %v223
  %v225 = vpop.f32.mrb[0].mxu0
  %226 = vmatprep.mubr.f32.mxu0 0.0
  %227 = vmatmul.mubr.f32.gmra.mrb[0].mxu0 %v107
  %v228 = vpop.f32.mrb[0].mxu0
  %v229 = vadd.f32 %v97, %v228
  %v230 = vpop.f32.mrb[0].mxu0
  %231 = vmatprep.mubr.f32.mxu0 0.0
  %232 = vmatmul.mubr.f32.gmra.mrb[0].mxu0 %v110
  %v233 = vpop.f32.mrb[0].mxu0
  %v234 = vadd.f32 %v97, %v233
  %v235 = vpop.f32.mrb[0].mxu0
  %236 = vmatprep.mubr.f32.mxu0 0.0
  %237 = vmatmul.mubr.f32.gmra.mrb[0].mxu0 %v113
  %v238 = vpop.f32.mrb[0].mxu0
  %v239 = vadd.f32 %v97, %v238
  %v240 = vpop.f32.mrb[0].mxu0
  %241 = vmatprep.mubr.f32.mxu0 0.0
  %242 = vmatmul.mubr.f32.gmra.mrb[0].mxu0 %v116
  %v243 = vpop.f32.mrb[0].mxu0
  %v244 = vadd.f32 %v97, %v243
  %v245 = vpop.f32.mrb[0].mxu0
  %246 = vmatprep.mubr.f32.mxu0 0.0
  %247 = vmatmul.mubr.f32.gmra.mrb[0].mxu0 %v119
  %v248 = vpop.f32.mrb[0].mxu0
  %v249 = vadd.f32 %v97, %v248
  %v250 = vpop.f32.mrb[0].mxu0
  %251 = vmatprep.mubr.f32.mxu0 0.0
  %252 = vmatmul.mubr.f32.gmra.mrb[0].mxu0 %v122
  %v253 = vpop.f32.mrb[0].mxu0
  %v254 = vadd.f32 %v97, %v253
  %v255 = vpop.f32.mrb[0].mxu0
  %256 = vmatprep.mubr.f32.mxu0 0.0
  %257 = vmatmul.mubr.f32.gmra.mrb[0].mxu0 %v125
  %v258 = vpop.f32.mrb[0].mxu0
  %v259 = vadd.f32 %v97, %v258
  %v260 = vpop.f32.mrb[0].mxu0
  %261 = vmatprep.mubr.f32.mxu0 0.0
  %262 = vmatmul.mubr.f32.gmra.mrb[0].mxu0 %v128
  %v263 = vpop.f32.mrb[0].mxu0
  %v264 = vadd.f32 %v97, %v263
  %v265 = vpop.f32.mrb[0].mxu0
  %266 = vmatprep.mubr.f32.mxu0 0.0
  %267 = vmatmul.mubr.f32.gmra.mrb[0].mxu0 %v131
  %v268 = vpop.f32.mrb[0].mxu0
  %v269 = vadd.f32 %v97, %v268
  %v270 = vpop.f32.mrb[0].mxu0
  %271 = vmatprep.mubr.f32.mxu0 0.0
  %272 = vmatmul.mubr.f32.gmra.mrb[0].mxu0 %v134
  %v273 = vpop.f32.mrb[0].mxu0
  %v274 = vadd.f32 %v97, %v273
  %v275 = vpop.f32.mrb[0].mxu0
  %276 = vmatprep.mubr.f32.mxu0 0.0
  %277 = vmatmul.mubr.f32.gmra.mrb[0].mxu0 %v137
  %v278 = vpop.f32.mrb[0].mxu0
  %v279 = vadd.f32 %v97, %v278
  %v280 = vpop.f32.mrb[0].mxu0
  %281 = vmatprep.mubr.f32.mxu0 0.0
  %282 = vmatmul.mubr.f32.gmra.mrb[0].mxu0 %v140
  %v283 = vpop.f32.mrb[0].mxu0
  %v284 = vadd.f32 %v97, %v283
  %v285 = vpop.f32.mrb[0].mxu0
  %286 = vmatprep.mubr.f32.mxu0 0.0
  %287 = vmatmul.mubr.f32.gmra.mrb[0].mxu0 %v143
  %v288 = vpop.f32.mrb[0].mxu0
  %v289 = vadd.f32 %v97, %v288
  %v290 = vpop.f32.mrb[0].mxu0
  %291 = vmatprep.mubr.f32.mxu0 0.0
  %292 = vmatmul.mubr.f32.gmra.mrb[0].mxu0 %v146
  %v293 = vpop.f32.mrb[0].mxu0
  %v294 = vadd.f32 %v97, %v293
  %v295 = vpop.f32.mrb[0].mxu0
  %296 = vdwg.mxu0
  %vm297 = vcmask 261120
  %v299 = vsel %vm297, %v59, 0
  %v302 = vsel %vm297, %v60, 0
  %304 = vmatprep.subr.mxu0 0.0
  %305 = vmatpush1.msra.mxu0 %v64
  %306 = vmatprep.subr.mxu0 0.0
  %307 = vmatpush1.msra.mxu0 %v65
  %308 = vmatprep.subr.mxu0 0.0
  %309 = vmatpush1.msra.mxu0 %v66
  %310 = vmatprep.subr.mxu0 0.0
  %311 = vmatpush1.msra.mxu0 %v67
  %312 = vmatprep.subr.mxu0 0.0
  %313 = vmatpush1.msra.mxu0 0.0
  %314 = vmatprep.subr.mxu0 0.0
  %315 = vmatpush1.msra.mxu0 0.0
  %316 = vmatprep.subr.mxu0 0.0
  %317 = vmatpush1.msra.mxu0 0.0
  %318 = vmatprep.subr.mxu0 0.0
  %319 = vmatpush1.msra.mxu0 0.0
  %320 = vmatprep.subr.mxu0 0.0
  %321 = vmatpush1.msra.mxu0 0.0
  %322 = vmatprep.subr.mxu0 0.0
  %323 = vmatpush1.msra.mxu0 0.0
  %324 = vmatprep.subr.mxu0 0.0
  %325 = vmatpush1.msra.mxu0 0.0
  %326 = vmatprep.subr.mxu0 0.0
  %327 = vmatpush1.msra.mxu0 0.0
  %328 = vmatprep.subr.mxu0 0.0
  %329 = vmatpush1.msra.mxu0 0.0
  %330 = vmatprep.subr.mxu0 0.0
  %331 = vmatpush1.msra.mxu0 0.0
  %332 = vmatprep.subr.mxu0 0.0
  %333 = vmatpush1.msra.mxu0 0.0
  %334 = vmatprep.subr.mxu0 0.0
  %335 = vmatpush1.msra.mxu0 0.0
  %336 = vmatprep.subr.mxu0 0.0
  %337 = vmatpush1.msra.mxu0 0.0
  %338 = vmatprep.subr.mxu0 0.0
  %339 = vmatpush1.msra.mxu0 0.0
  %340 = vmatprep.subr.mxu0 0.0
  %341 = vmatpush1.msra.mxu0 0.0
  %342 = vmatprep.subr.mxu0 0.0
  %343 = vmatpush1.msra.mxu0 0.0
  %344 = vmatprep.subr.mxu0 0.0
  %345 = vmatpush1.msra.mxu0 0.0
  %346 = vmatprep.subr.mxu0 0.0
  %347 = vmatpush1.msra.mxu0 0.0
  %348 = vmatprep.subr.mxu0 0.0
  %349 = vmatpush1.msra.mxu0 0.0
  %350 = vmatprep.subr.mxu0 0.0
  %351 = vmatpush1.msra.mxu0 0.0
  %352 = vmatprep.subr.mxu0 0.0
  %353 = vmatpush1.msra.mxu0 0.0
  %354 = vmatprep.subr.mxu0 0.0
  %355 = vmatpush1.msra.mxu0 0.0
  %356 = vmatprep.subr.mxu0 0.0
  %357 = vmatpush1.msra.mxu0 0.0
  %358 = vmatprep.subr.mxu0 0.0
  %359 = vmatpush1.msra.mxu0 0.0
  %360 = vmatprep.subr.mxu0 0.0
  %361 = vmatpush1.msra.mxu0 0.0
  %362 = vmatprep.subr.mxu0 0.0
  %363 = vmatpush1.msra.mxu0 0.0
  %364 = vmatprep.subr.mxu0 0.0
  %365 = vmatpush1.msra.mxu0 0.0
  %366 = vmatprep.subr.mxu0 0.0
  %367 = vmatpush1.msra.mxu0 0.0
  %368 = vmatprep.mubr.f32.mxu0 0.0
  %369 = vmatmul.mubr.f32.gmra.mrb[0].mxu0 %v299
  %v370 = vpop.f32.mrb[0].mxu0
  %v371 = vadd.f32 0.0, %v370
  %v372 = vpop.f32.mrb[0].mxu0
  %373 = vmatprep.mubr.f32.mxu0 0.0
  %374 = vmatmul.mubr.f32.gmra.mrb[0].mxu0 %v302
  %v375 = vpop.f32.mrb[0].mxu0
  %v376 = vadd.f32 0.0, %v375
  %v377 = vpop.f32.mrb[0].mxu0
  %378 = vdwg.mxu0
  %v379 = vadd.f32 %v219, %v371
  %v380 = vadd.f32 %v224, %v376
  %v381 = vxor.u32 %v379, 2147483648
  %v382 = vxor.u32 %v380, 2147483648
  %v383 = vmul.f32 %v381, 1.442695
  %v384 = vpow.pop %v383
  %v385 = vmul.f32 %v382, 1.442695
  %v386 = vpow.pop %v385
  %v387 = vadd.f32 %v384, 1.0
  %v388 = vadd.f32 %v386, 1.0
  %v389 = vrcp.pop %v387
  %v390 = vmul.f32 1.0, %v389
  %v391 = vrcp.pop %v388
  %v392 = vmul.f32 1.0, %v391
  %v393 = vtanh.pop %v379
  %v394 = vtanh.pop %v380
  %397 = vrot.lane.b32.xlu0 %v61, 32
  %v398 = vpop.permute.xlu0 %397
  %399 = vrot.lane.b32.xlu0 %v62, 32
  %v400 = vpop.permute.xlu0 %399
  %v403 = vmul.f32 %v390, %v398
  %v404 = vmul.f32 %v392, %v400
  %407 = vrot.lane.b32.xlu0 %v393, 64
  %v408 = vpop.permute.xlu0 %407
  %409 = vrot.lane.b32.xlu0 %v394, 64
  %v410 = vpop.permute.xlu0 %409
  %v413 = vmul.f32 %v390, %v408
  %v414 = vmul.f32 %v392, %v410
  %417 = vrot.lane.b32.xlu0 %v413, 32
  %v418 = vpop.permute.xlu0 %417
  %419 = vrot.lane.b32.xlu0 %v414, 32
  %v420 = vpop.permute.xlu0 %419
  %v423 = vadd.f32 %v403, %v418
  %v424 = vadd.f32 %v404, %v420
  %v425 = vtanh.pop %v423
  %v426 = vtanh.pop %v424
  %429 = vrot.lane.b32.xlu0 %v425, 64
  %v430 = vpop.permute.xlu0 %429
  %431 = vrot.lane.b32.xlu0 %v426, 64
  %v432 = vpop.permute.xlu0 %431
  %v435 = vmul.f32 %v390, %v430
  %v436 = vmul.f32 %v392, %v432
  %439 = vrot.lane.b32.xlu0 %v435, 32
  %v440 = vpop.permute.xlu0 %439
  %441 = vrot.lane.b32.xlu0 %v436, 32
  %v442 = vpop.permute.xlu0 %441
  %v443 = vsel %vm297, %v440, 0
  %v445 = vsel %vm297, %v442, 0
  %447 = vmatprep.subr.mxu0 0.0
  %448 = vmatpush1.msra.mxu0 %v64
  %449 = vmatprep.subr.mxu0 0.0
  %450 = vmatpush1.msra.mxu0 %v65
  %451 = vmatprep.subr.mxu0 0.0
  %452 = vmatpush1.msra.mxu0 %v66
  %453 = vmatprep.subr.mxu0 0.0
  %454 = vmatpush1.msra.mxu0 %v67
  %455 = vmatprep.subr.mxu0 0.0
  %456 = vmatpush1.msra.mxu0 0.0
  %457 = vmatprep.subr.mxu0 0.0
  %458 = vmatpush1.msra.mxu0 0.0
  %459 = vmatprep.subr.mxu0 0.0
  %460 = vmatpush1.msra.mxu0 0.0
  %461 = vmatprep.subr.mxu0 0.0
  %462 = vmatpush1.msra.mxu0 0.0
  %463 = vmatprep.subr.mxu0 0.0
  %464 = vmatpush1.msra.mxu0 0.0
  %465 = vmatprep.subr.mxu0 0.0
  %466 = vmatpush1.msra.mxu0 0.0
  %467 = vmatprep.subr.mxu0 0.0
  %468 = vmatpush1.msra.mxu0 0.0
  %469 = vmatprep.subr.mxu0 0.0
  %470 = vmatpush1.msra.mxu0 0.0
  %471 = vmatprep.subr.mxu0 0.0
  %472 = vmatpush1.msra.mxu0 0.0
  %473 = vmatprep.subr.mxu0 0.0
  %474 = vmatpush1.msra.mxu0 0.0
  %475 = vmatprep.subr.mxu0 0.0
  %476 = vmatpush1.msra.mxu0 0.0
  %477 = vmatprep.subr.mxu0 0.0
  %478 = vmatpush1.msra.mxu0 0.0
  %479 = vmatprep.subr.mxu0 0.0
  %480 = vmatpush1.msra.mxu0 0.0
  %481 = vmatprep.subr.mxu0 0.0
  %482 = vmatpush1.msra.mxu0 0.0
  %483 = vmatprep.subr.mxu0 0.0
  %484 = vmatpush1.msra.mxu0 0.0
  %485 = vmatprep.subr.mxu0 0.0
  %486 = vmatpush1.msra.mxu0 0.0
  %487 = vmatprep.subr.mxu0 0.0
  %488 = vmatpush1.msra.mxu0 0.0
  %489 = vmatprep.subr.mxu0 0.0
  %490 = vmatpush1.msra.mxu0 0.0
  %491 = vmatprep.subr.mxu0 0.0
  %492 = vmatpush1.msra.mxu0 0.0
  %493 = vmatprep.subr.mxu0 0.0
  %494 = vmatpush1.msra.mxu0 0.0
  %495 = vmatprep.subr.mxu0 0.0
  %496 = vmatpush1.msra.mxu0 0.0
  %497 = vmatprep.subr.mxu0 0.0
  %498 = vmatpush1.msra.mxu0 0.0
  %499 = vmatprep.subr.mxu0 0.0
  %500 = vmatpush1.msra.mxu0 0.0
  %501 = vmatprep.subr.mxu0 0.0
  %502 = vmatpush1.msra.mxu0 0.0
  %503 = vmatprep.subr.mxu0 0.0
  %504 = vmatpush1.msra.mxu0 0.0
  %505 = vmatprep.subr.mxu0 0.0
  %506 = vmatpush1.msra.mxu0 0.0
  %507 = vmatprep.subr.mxu0 0.0
  %508 = vmatpush1.msra.mxu0 0.0
  %509 = vmatprep.subr.mxu0 0.0
  %510 = vmatpush1.msra.mxu0 0.0
  %511 = vmatprep.mubr.f32.mxu0 0.0
  %512 = vmatmul.mubr.f32.gmra.mrb[0].mxu0 %v443
  %v513 = vpop.f32.mrb[0].mxu0
  %v514 = vadd.f32 0.0, %v513
  %v515 = vpop.f32.mrb[0].mxu0
  %516 = vmatprep.mubr.f32.mxu0 0.0
  %517 = vmatmul.mubr.f32.gmra.mrb[0].mxu0 %v445
  %v518 = vpop.f32.mrb[0].mxu0
  %v519 = vadd.f32 0.0, %v518
  %v520 = vpop.f32.mrb[0].mxu0
  %521 = vdwg.mxu0
  %v522 = vadd.f32 %v229, %v514
  %v523 = vadd.f32 %v234, %v519
  %v524 = vxor.u32 %v522, 2147483648
  %v525 = vxor.u32 %v523, 2147483648
  %v526 = vmul.f32 %v524, 1.442695
  %v527 = vpow.pop %v526
  %v528 = vmul.f32 %v525, 1.442695
  %v529 = vpow.pop %v528
  %v530 = vadd.f32 %v527, 1.0
  %v531 = vadd.f32 %v529, 1.0
  %v532 = vrcp.pop %v530
  %v533 = vmul.f32 1.0, %v532
  %v534 = vrcp.pop %v531
  %v535 = vmul.f32 1.0, %v534
  %v536 = vtanh.pop %v522
  %v537 = vtanh.pop %v523
  %v538 = vmul.f32 %v533, %v423
  %v539 = vmul.f32 %v535, %v424
  %542 = vrot.lane.b32.xlu0 %v536, 64
  %v543 = vpop.permute.xlu0 %542
  %544 = vrot.lane.b32.xlu0 %v537, 64
  %v545 = vpop.permute.xlu0 %544
  %v548 = vmul.f32 %v533, %v543
  %v549 = vmul.f32 %v535, %v545
  %552 = vrot.lane.b32.xlu0 %v548, 32
  %v553 = vpop.permute.xlu0 %552
  %554 = vrot.lane.b32.xlu0 %v549, 32
  %v555 = vpop.permute.xlu0 %554
  %v558 = vadd.f32 %v538, %v553
  %v559 = vadd.f32 %v539, %v555
  %v560 = vtanh.pop %v558
  %v561 = vtanh.pop %v559
  %564 = vrot.lane.b32.xlu0 %v560, 64
  %v565 = vpop.permute.xlu0 %564
  %566 = vrot.lane.b32.xlu0 %v561, 64
  %v567 = vpop.permute.xlu0 %566
  %v570 = vmul.f32 %v533, %v565
  %v571 = vmul.f32 %v535, %v567
  %574 = vrot.lane.b32.xlu0 %v570, 32
  %v575 = vpop.permute.xlu0 %574
  %576 = vrot.lane.b32.xlu0 %v571, 32
  %v577 = vpop.permute.xlu0 %576
  %v578 = vsel %vm297, %v575, 0
  %v580 = vsel %vm297, %v577, 0
  %582 = vmatprep.subr.mxu0 0.0
  %583 = vmatpush1.msra.mxu0 %v64
  %584 = vmatprep.subr.mxu0 0.0
  %585 = vmatpush1.msra.mxu0 %v65
  %586 = vmatprep.subr.mxu0 0.0
  %587 = vmatpush1.msra.mxu0 %v66
  %588 = vmatprep.subr.mxu0 0.0
  %589 = vmatpush1.msra.mxu0 %v67
  %590 = vmatprep.subr.mxu0 0.0
  %591 = vmatpush1.msra.mxu0 0.0
  %592 = vmatprep.subr.mxu0 0.0
  %593 = vmatpush1.msra.mxu0 0.0
  %594 = vmatprep.subr.mxu0 0.0
  %595 = vmatpush1.msra.mxu0 0.0
  %596 = vmatprep.subr.mxu0 0.0
  %597 = vmatpush1.msra.mxu0 0.0
  %598 = vmatprep.subr.mxu0 0.0
  %599 = vmatpush1.msra.mxu0 0.0
  %600 = vmatprep.subr.mxu0 0.0
  %601 = vmatpush1.msra.mxu0 0.0
  %602 = vmatprep.subr.mxu0 0.0
  %603 = vmatpush1.msra.mxu0 0.0
  %604 = vmatprep.subr.mxu0 0.0
  %605 = vmatpush1.msra.mxu0 0.0
  %606 = vmatprep.subr.mxu0 0.0
  %607 = vmatpush1.msra.mxu0 0.0
  %608 = vmatprep.subr.mxu0 0.0
  %609 = vmatpush1.msra.mxu0 0.0
  %610 = vmatprep.subr.mxu0 0.0
  %611 = vmatpush1.msra.mxu0 0.0
  %612 = vmatprep.subr.mxu0 0.0
  %613 = vmatpush1.msra.mxu0 0.0
  %614 = vmatprep.subr.mxu0 0.0
  %615 = vmatpush1.msra.mxu0 0.0
  %616 = vmatprep.subr.mxu0 0.0
  %617 = vmatpush1.msra.mxu0 0.0
  %618 = vmatprep.subr.mxu0 0.0
  %619 = vmatpush1.msra.mxu0 0.0
  %620 = vmatprep.subr.mxu0 0.0
  %621 = vmatpush1.msra.mxu0 0.0
  %622 = vmatprep.subr.mxu0 0.0
  %623 = vmatpush1.msra.mxu0 0.0
  %624 = vmatprep.subr.mxu0 0.0
  %625 = vmatpush1.msra.mxu0 0.0
  %626 = vmatprep.subr.mxu0 0.0
  %627 = vmatpush1.msra.mxu0 0.0
  %628 = vmatprep.subr.mxu0 0.0
  %629 = vmatpush1.msra.mxu0 0.0
  %630 = vmatprep.subr.mxu0 0.0
  %631 = vmatpush1.msra.mxu0 0.0
  %632 = vmatprep.subr.mxu0 0.0
  %633 = vmatpush1.msra.mxu0 0.0
  %634 = vmatprep.subr.mxu0 0.0
  %635 = vmatpush1.msra.mxu0 0.0
  %636 = vmatprep.subr.mxu0 0.0
  %637 = vmatpush1.msra.mxu0 0.0
  %638 = vmatprep.subr.mxu0 0.0
  %639 = vmatpush1.msra.mxu0 0.0
  %640 = vmatprep.subr.mxu0 0.0
  %641 = vmatpush1.msra.mxu0 0.0
  %642 = vmatprep.subr.mxu0 0.0
  %643 = vmatpush1.msra.mxu0 0.0
  %644 = vmatprep.subr.mxu0 0.0
  %645 = vmatpush1.msra.mxu0 0.0
  %646 = vmatprep.mubr.f32.mxu0 0.0
  %647 = vmatmul.mubr.f32.gmra.mrb[0].mxu0 %v578
  %v648 = vpop.f32.mrb[0].mxu0
  %v649 = vadd.f32 0.0, %v648
  %v650 = vpop.f32.mrb[0].mxu0
  %651 = vmatprep.mubr.f32.mxu0 0.0
  %652 = vmatmul.mubr.f32.gmra.mrb[0].mxu0 %v580
  %v653 = vpop.f32.mrb[0].mxu0
  %v654 = vadd.f32 0.0, %v653
  %v655 = vpop.f32.mrb[0].mxu0
  %656 = vdwg.mxu0
  %v657 = vadd.f32 %v239, %v649
  %v658 = vadd.f32 %v244, %v654
  %v659 = vxor.u32 %v657, 2147483648
  %v660 = vxor.u32 %v658, 2147483648
  %v661 = vmul.f32 %v659, 1.442695
  %v662 = vpow.pop %v661
  %v663 = vmul.f32 %v660, 1.442695
  %v664 = vpow.pop %v663
  %v665 = vadd.f32 %v662, 1.0
  %v666 = vadd.f32 %v664, 1.0
  %v667 = vrcp.pop %v665
  %v668 = vmul.f32 1.0, %v667
  %v669 = vrcp.pop %v666
  %v670 = vmul.f32 1.0, %v669
  %v671 = vtanh.pop %v657
  %v672 = vtanh.pop %v658
  %v673 = vmul.f32 %v668, %v558
  %v674 = vmul.f32 %v670, %v559
  %677 = vrot.lane.b32.xlu0 %v671, 64
  %v678 = vpop.permute.xlu0 %677
  %679 = vrot.lane.b32.xlu0 %v672, 64
  %v680 = vpop.permute.xlu0 %679
  %v683 = vmul.f32 %v668, %v678
  %v684 = vmul.f32 %v670, %v680
  %687 = vrot.lane.b32.xlu0 %v683, 32
  %v688 = vpop.permute.xlu0 %687
  %689 = vrot.lane.b32.xlu0 %v684, 32
  %v690 = vpop.permute.xlu0 %689
  %v693 = vadd.f32 %v673, %v688
  %v694 = vadd.f32 %v674, %v690
  %v695 = vtanh.pop %v693
  %v696 = vtanh.pop %v694
  %699 = vrot.lane.b32.xlu0 %v695, 64
  %v700 = vpop.permute.xlu0 %699
  %701 = vrot.lane.b32.xlu0 %v696, 64
  %v702 = vpop.permute.xlu0 %701
  %v705 = vmul.f32 %v668, %v700
  %v706 = vmul.f32 %v670, %v702
  %709 = vrot.lane.b32.xlu0 %v705, 32
  %v710 = vpop.permute.xlu0 %709
  %711 = vrot.lane.b32.xlu0 %v706, 32
  %v712 = vpop.permute.xlu0 %711
  %v713 = vsel %vm297, %v710, 0
  %v715 = vsel %vm297, %v712, 0
  %717 = vmatprep.subr.mxu0 0.0
  %718 = vmatpush1.msra.mxu0 %v64
  %719 = vmatprep.subr.mxu0 0.0
  %720 = vmatpush1.msra.mxu0 %v65
  %721 = vmatprep.subr.mxu0 0.0
  %722 = vmatpush1.msra.mxu0 %v66
  %723 = vmatprep.subr.mxu0 0.0
  %724 = vmatpush1.msra.mxu0 %v67
  %725 = vmatprep.subr.mxu0 0.0
  %726 = vmatpush1.msra.mxu0 0.0
  %727 = vmatprep.subr.mxu0 0.0
  %728 = vmatpush1.msra.mxu0 0.0
  %729 = vmatprep.subr.mxu0 0.0
  %730 = vmatpush1.msra.mxu0 0.0
  %731 = vmatprep.subr.mxu0 0.0
  %732 = vmatpush1.msra.mxu0 0.0
  %733 = vmatprep.subr.mxu0 0.0
  %734 = vmatpush1.msra.mxu0 0.0
  %735 = vmatprep.subr.mxu0 0.0
  %736 = vmatpush1.msra.mxu0 0.0
  %737 = vmatprep.subr.mxu0 0.0
  %738 = vmatpush1.msra.mxu0 0.0
  %739 = vmatprep.subr.mxu0 0.0
  %740 = vmatpush1.msra.mxu0 0.0
  %741 = vmatprep.subr.mxu0 0.0
  %742 = vmatpush1.msra.mxu0 0.0
  %743 = vmatprep.subr.mxu0 0.0
  %744 = vmatpush1.msra.mxu0 0.0
  %745 = vmatprep.subr.mxu0 0.0
  %746 = vmatpush1.msra.mxu0 0.0
  %747 = vmatprep.subr.mxu0 0.0
  %748 = vmatpush1.msra.mxu0 0.0
  %749 = vmatprep.subr.mxu0 0.0
  %750 = vmatpush1.msra.mxu0 0.0
  %751 = vmatprep.subr.mxu0 0.0
  %752 = vmatpush1.msra.mxu0 0.0
  %753 = vmatprep.subr.mxu0 0.0
  %754 = vmatpush1.msra.mxu0 0.0
  %755 = vmatprep.subr.mxu0 0.0
  %756 = vmatpush1.msra.mxu0 0.0
  %757 = vmatprep.subr.mxu0 0.0
  %758 = vmatpush1.msra.mxu0 0.0
  %759 = vmatprep.subr.mxu0 0.0
  %760 = vmatpush1.msra.mxu0 0.0
  %761 = vmatprep.subr.mxu0 0.0
  %762 = vmatpush1.msra.mxu0 0.0
  %763 = vmatprep.subr.mxu0 0.0
  %764 = vmatpush1.msra.mxu0 0.0
  %765 = vmatprep.subr.mxu0 0.0
  %766 = vmatpush1.msra.mxu0 0.0
  %767 = vmatprep.subr.mxu0 0.0
  %768 = vmatpush1.msra.mxu0 0.0
  %769 = vmatprep.subr.mxu0 0.0
  %770 = vmatpush1.msra.mxu0 0.0
  %771 = vmatprep.subr.mxu0 0.0
  %772 = vmatpush1.msra.mxu0 0.0
  %773 = vmatprep.subr.mxu0 0.0
  %774 = vmatpush1.msra.mxu0 0.0
  %775 = vmatprep.subr.mxu0 0.0
  %776 = vmatpush1.msra.mxu0 0.0
  %777 = vmatprep.subr.mxu0 0.0
  %778 = vmatpush1.msra.mxu0 0.0
  %779 = vmatprep.subr.mxu0 0.0
  %780 = vmatpush1.msra.mxu0 0.0
  %781 = vmatprep.mubr.f32.mxu0 0.0
  %782 = vmatmul.mubr.f32.gmra.mrb[0].mxu0 %v713
  %v783 = vpop.f32.mrb[0].mxu0
  %v784 = vadd.f32 0.0, %v783
  %v785 = vpop.f32.mrb[0].mxu0
  %786 = vmatprep.mubr.f32.mxu0 0.0
  %787 = vmatmul.mubr.f32.gmra.mrb[0].mxu0 %v715
  %v788 = vpop.f32.mrb[0].mxu0
  %v789 = vadd.f32 0.0, %v788
  %v790 = vpop.f32.mrb[0].mxu0
  %791 = vdwg.mxu0
  %v792 = vadd.f32 %v249, %v784
  %v793 = vadd.f32 %v254, %v789
  %v794 = vxor.u32 %v792, 2147483648
  %v795 = vxor.u32 %v793, 2147483648
  %v796 = vmul.f32 %v794, 1.442695
  %v797 = vpow.pop %v796
  %v798 = vmul.f32 %v795, 1.442695
  %v799 = vpow.pop %v798
  %v800 = vadd.f32 %v797, 1.0
  %v801 = vadd.f32 %v799, 1.0
  %v802 = vrcp.pop %v800
  %v803 = vmul.f32 1.0, %v802
  %v804 = vrcp.pop %v801
  %v805 = vmul.f32 1.0, %v804
  %v806 = vtanh.pop %v792
  %v807 = vtanh.pop %v793
  %v808 = vmul.f32 %v803, %v693
  %v809 = vmul.f32 %v805, %v694
  %812 = vrot.lane.b32.xlu0 %v806, 64
  %v813 = vpop.permute.xlu0 %812
  %814 = vrot.lane.b32.xlu0 %v807, 64
  %v815 = vpop.permute.xlu0 %814
  %v818 = vmul.f32 %v803, %v813
  %v819 = vmul.f32 %v805, %v815
  %822 = vrot.lane.b32.xlu0 %v818, 32
  %v823 = vpop.permute.xlu0 %822
  %824 = vrot.lane.b32.xlu0 %v819, 32
  %v825 = vpop.permute.xlu0 %824
  %v828 = vadd.f32 %v808, %v823
  %v829 = vadd.f32 %v809, %v825
  %v830 = vtanh.pop %v828
  %v831 = vtanh.pop %v829
  %834 = vrot.lane.b32.xlu0 %v830, 64
  %v835 = vpop.permute.xlu0 %834
  %836 = vrot.lane.b32.xlu0 %v831, 64
  %v837 = vpop.permute.xlu0 %836
  %v840 = vmul.f32 %v803, %v835
  %v841 = vmul.f32 %v805, %v837
  %844 = vrot.lane.b32.xlu0 %v840, 32
  %v845 = vpop.permute.xlu0 %844
  %846 = vrot.lane.b32.xlu0 %v841, 32
  %v847 = vpop.permute.xlu0 %846
  %v848 = vsel %vm297, %v845, 0
  %v850 = vsel %vm297, %v847, 0
  %852 = vmatprep.subr.mxu0 0.0
  %853 = vmatpush1.msra.mxu0 %v64
  %854 = vmatprep.subr.mxu0 0.0
  %855 = vmatpush1.msra.mxu0 %v65
  %856 = vmatprep.subr.mxu0 0.0
  %857 = vmatpush1.msra.mxu0 %v66
  %858 = vmatprep.subr.mxu0 0.0
  %859 = vmatpush1.msra.mxu0 %v67
  %860 = vmatprep.subr.mxu0 0.0
  %861 = vmatpush1.msra.mxu0 0.0
  %862 = vmatprep.subr.mxu0 0.0
  %863 = vmatpush1.msra.mxu0 0.0
  %864 = vmatprep.subr.mxu0 0.0
  %865 = vmatpush1.msra.mxu0 0.0
  %866 = vmatprep.subr.mxu0 0.0
  %867 = vmatpush1.msra.mxu0 0.0
  %868 = vmatprep.subr.mxu0 0.0
  %869 = vmatpush1.msra.mxu0 0.0
  %870 = vmatprep.subr.mxu0 0.0
  %871 = vmatpush1.msra.mxu0 0.0
  %872 = vmatprep.subr.mxu0 0.0
  %873 = vmatpush1.msra.mxu0 0.0
  %874 = vmatprep.subr.mxu0 0.0
  %875 = vmatpush1.msra.mxu0 0.0
  %876 = vmatprep.subr.mxu0 0.0
  %877 = vmatpush1.msra.mxu0 0.0
  %878 = vmatprep.subr.mxu0 0.0
  %879 = vmatpush1.msra.mxu0 0.0
  %880 = vmatprep.subr.mxu0 0.0
  %881 = vmatpush1.msra.mxu0 0.0
  %882 = vmatprep.subr.mxu0 0.0
  %883 = vmatpush1.msra.mxu0 0.0
  %884 = vmatprep.subr.mxu0 0.0
  %885 = vmatpush1.msra.mxu0 0.0
  %886 = vmatprep.subr.mxu0 0.0
  %887 = vmatpush1.msra.mxu0 0.0
  %888 = vmatprep.subr.mxu0 0.0
  %889 = vmatpush1.msra.mxu0 0.0
  %890 = vmatprep.subr.mxu0 0.0
  %891 = vmatpush1.msra.mxu0 0.0
  %892 = vmatprep.subr.mxu0 0.0
  %893 = vmatpush1.msra.mxu0 0.0
  %894 = vmatprep.subr.mxu0 0.0
  %895 = vmatpush1.msra.mxu0 0.0
  %896 = vmatprep.subr.mxu0 0.0
  %897 = vmatpush1.msra.mxu0 0.0
  %898 = vmatprep.subr.mxu0 0.0
  %899 = vmatpush1.msra.mxu0 0.0
  %900 = vmatprep.subr.mxu0 0.0
  %901 = vmatpush1.msra.mxu0 0.0
  %902 = vmatprep.subr.mxu0 0.0
  %903 = vmatpush1.msra.mxu0 0.0
  %904 = vmatprep.subr.mxu0 0.0
  %905 = vmatpush1.msra.mxu0 0.0
  %906 = vmatprep.subr.mxu0 0.0
  %907 = vmatpush1.msra.mxu0 0.0
  %908 = vmatprep.subr.mxu0 0.0
  %909 = vmatpush1.msra.mxu0 0.0
  %910 = vmatprep.subr.mxu0 0.0
  %911 = vmatpush1.msra.mxu0 0.0
  %912 = vmatprep.subr.mxu0 0.0
  %913 = vmatpush1.msra.mxu0 0.0
  %914 = vmatprep.subr.mxu0 0.0
  %915 = vmatpush1.msra.mxu0 0.0
  %916 = vmatprep.mubr.f32.mxu0 0.0
  %917 = vmatmul.mubr.f32.gmra.mrb[0].mxu0 %v848
  %v918 = vpop.f32.mrb[0].mxu0
  %v919 = vadd.f32 0.0, %v918
  %v920 = vpop.f32.mrb[0].mxu0
  %921 = vmatprep.mubr.f32.mxu0 0.0
  %922 = vmatmul.mubr.f32.gmra.mrb[0].mxu0 %v850
  %v923 = vpop.f32.mrb[0].mxu0
  %v924 = vadd.f32 0.0, %v923
  %v925 = vpop.f32.mrb[0].mxu0
  %926 = vdwg.mxu0
  %v927 = vadd.f32 %v259, %v919
  %v928 = vadd.f32 %v264, %v924
  %v929 = vxor.u32 %v927, 2147483648
  %v930 = vxor.u32 %v928, 2147483648
  %v931 = vmul.f32 %v929, 1.442695
  %v932 = vpow.pop %v931
  %v933 = vmul.f32 %v930, 1.442695
  %v934 = vpow.pop %v933
  %v935 = vadd.f32 %v932, 1.0
  %v936 = vadd.f32 %v934, 1.0
  %v937 = vrcp.pop %v935
  %v938 = vmul.f32 1.0, %v937
  %v939 = vrcp.pop %v936
  %v940 = vmul.f32 1.0, %v939
  %v941 = vtanh.pop %v927
  %v942 = vtanh.pop %v928
  %v943 = vmul.f32 %v938, %v828
  %v944 = vmul.f32 %v940, %v829
  %947 = vrot.lane.b32.xlu0 %v941, 64
  %v948 = vpop.permute.xlu0 %947
  %949 = vrot.lane.b32.xlu0 %v942, 64
  %v950 = vpop.permute.xlu0 %949
  %v953 = vmul.f32 %v938, %v948
  %v954 = vmul.f32 %v940, %v950
  %957 = vrot.lane.b32.xlu0 %v953, 32
  %v958 = vpop.permute.xlu0 %957
  %959 = vrot.lane.b32.xlu0 %v954, 32
  %v960 = vpop.permute.xlu0 %959
  %v963 = vadd.f32 %v943, %v958
  %v964 = vadd.f32 %v944, %v960
  %v965 = vtanh.pop %v963
  %v966 = vtanh.pop %v964
  %969 = vrot.lane.b32.xlu0 %v965, 64
  %v970 = vpop.permute.xlu0 %969
  %971 = vrot.lane.b32.xlu0 %v966, 64
  %v972 = vpop.permute.xlu0 %971
  %v975 = vmul.f32 %v938, %v970
  %v976 = vmul.f32 %v940, %v972
  %979 = vrot.lane.b32.xlu0 %v975, 32
  %v980 = vpop.permute.xlu0 %979
  %981 = vrot.lane.b32.xlu0 %v976, 32
  %v982 = vpop.permute.xlu0 %981
  %v983 = vsel %vm297, %v980, 0
  %v985 = vsel %vm297, %v982, 0
  %987 = vmatprep.subr.mxu0 0.0
  %988 = vmatpush1.msra.mxu0 %v64
  %989 = vmatprep.subr.mxu0 0.0
  %990 = vmatpush1.msra.mxu0 %v65
  %991 = vmatprep.subr.mxu0 0.0
  %992 = vmatpush1.msra.mxu0 %v66
  %993 = vmatprep.subr.mxu0 0.0
  %994 = vmatpush1.msra.mxu0 %v67
  %995 = vmatprep.subr.mxu0 0.0
  %996 = vmatpush1.msra.mxu0 0.0
  %997 = vmatprep.subr.mxu0 0.0
  %998 = vmatpush1.msra.mxu0 0.0
  %999 = vmatprep.subr.mxu0 0.0
  %1000 = vmatpush1.msra.mxu0 0.0
  %1001 = vmatprep.subr.mxu0 0.0
  %1002 = vmatpush1.msra.mxu0 0.0
  %1003 = vmatprep.subr.mxu0 0.0
  %1004 = vmatpush1.msra.mxu0 0.0
  %1005 = vmatprep.subr.mxu0 0.0
  %1006 = vmatpush1.msra.mxu0 0.0
  %1007 = vmatprep.subr.mxu0 0.0
  %1008 = vmatpush1.msra.mxu0 0.0
  %1009 = vmatprep.subr.mxu0 0.0
  %1010 = vmatpush1.msra.mxu0 0.0
  %1011 = vmatprep.subr.mxu0 0.0
  %1012 = vmatpush1.msra.mxu0 0.0
  %1013 = vmatprep.subr.mxu0 0.0
  %1014 = vmatpush1.msra.mxu0 0.0
  %1015 = vmatprep.subr.mxu0 0.0
  %1016 = vmatpush1.msra.mxu0 0.0
  %1017 = vmatprep.subr.mxu0 0.0
  %1018 = vmatpush1.msra.mxu0 0.0
  %1019 = vmatprep.subr.mxu0 0.0
  %1020 = vmatpush1.msra.mxu0 0.0
  %1021 = vmatprep.subr.mxu0 0.0
  %1022 = vmatpush1.msra.mxu0 0.0
  %1023 = vmatprep.subr.mxu0 0.0
  %1024 = vmatpush1.msra.mxu0 0.0
  %1025 = vmatprep.subr.mxu0 0.0
  %1026 = vmatpush1.msra.mxu0 0.0
  %1027 = vmatprep.subr.mxu0 0.0
  %1028 = vmatpush1.msra.mxu0 0.0
  %1029 = vmatprep.subr.mxu0 0.0
  %1030 = vmatpush1.msra.mxu0 0.0
  %1031 = vmatprep.subr.mxu0 0.0
  %1032 = vmatpush1.msra.mxu0 0.0
  %1033 = vmatprep.subr.mxu0 0.0
  %1034 = vmatpush1.msra.mxu0 0.0
  %1035 = vmatprep.subr.mxu0 0.0
  %1036 = vmatpush1.msra.mxu0 0.0
  %1037 = vmatprep.subr.mxu0 0.0
  %1038 = vmatpush1.msra.mxu0 0.0
  %1039 = vmatprep.subr.mxu0 0.0
  %1040 = vmatpush1.msra.mxu0 0.0
  %1041 = vmatprep.subr.mxu0 0.0
  %1042 = vmatpush1.msra.mxu0 0.0
  %1043 = vmatprep.subr.mxu0 0.0
  %1044 = vmatpush1.msra.mxu0 0.0
  %1045 = vmatprep.subr.mxu0 0.0
  %1046 = vmatpush1.msra.mxu0 0.0
  %1047 = vmatprep.subr.mxu0 0.0
  %1048 = vmatpush1.msra.mxu0 0.0
  %1049 = vmatprep.subr.mxu0 0.0
  %1050 = vmatpush1.msra.mxu0 0.0
  %1051 = vmatprep.mubr.f32.mxu0 0.0
  %1052 = vmatmul.mubr.f32.gmra.mrb[0].mxu0 %v983
  %v1053 = vpop.f32.mrb[0].mxu0
  %v1054 = vadd.f32 0.0, %v1053
  %v1055 = vpop.f32.mrb[0].mxu0
  %1056 = vmatprep.mubr.f32.mxu0 0.0
  %1057 = vmatmul.mubr.f32.gmra.mrb[0].mxu0 %v985
  %v1058 = vpop.f32.mrb[0].mxu0
  %v1059 = vadd.f32 0.0, %v1058
  %v1060 = vpop.f32.mrb[0].mxu0
  %1061 = vdwg.mxu0
  %v1062 = vadd.f32 %v269, %v1054
  %v1063 = vadd.f32 %v274, %v1059
  %v1064 = vxor.u32 %v1062, 2147483648
  %v1065 = vxor.u32 %v1063, 2147483648
  %v1066 = vmul.f32 %v1064, 1.442695
  %v1067 = vpow.pop %v1066
  %v1068 = vmul.f32 %v1065, 1.442695
  %v1069 = vpow.pop %v1068
  %v1070 = vadd.f32 %v1067, 1.0
  %v1071 = vadd.f32 %v1069, 1.0
  %v1072 = vrcp.pop %v1070
  %v1073 = vmul.f32 1.0, %v1072
  %v1074 = vrcp.pop %v1071
  %v1075 = vmul.f32 1.0, %v1074
  %v1076 = vtanh.pop %v1062
  %v1077 = vtanh.pop %v1063
  %v1078 = vmul.f32 %v1073, %v963
  %v1079 = vmul.f32 %v1075, %v964
  %1082 = vrot.lane.b32.xlu0 %v1076, 64
  %v1083 = vpop.permute.xlu0 %1082
  %1084 = vrot.lane.b32.xlu0 %v1077, 64
  %v1085 = vpop.permute.xlu0 %1084
  %v1088 = vmul.f32 %v1073, %v1083
  %v1089 = vmul.f32 %v1075, %v1085
  %1092 = vrot.lane.b32.xlu0 %v1088, 32
  %v1093 = vpop.permute.xlu0 %1092
  %1094 = vrot.lane.b32.xlu0 %v1089, 32
  %v1095 = vpop.permute.xlu0 %1094
  %v1098 = vadd.f32 %v1078, %v1093
  %v1099 = vadd.f32 %v1079, %v1095
  %v1100 = vtanh.pop %v1098
  %v1101 = vtanh.pop %v1099
  %1104 = vrot.lane.b32.xlu0 %v1100, 64
  %v1105 = vpop.permute.xlu0 %1104
  %1106 = vrot.lane.b32.xlu0 %v1101, 64
  %v1107 = vpop.permute.xlu0 %1106
  %v1110 = vmul.f32 %v1073, %v1105
  %v1111 = vmul.f32 %v1075, %v1107
  %1114 = vrot.lane.b32.xlu0 %v1110, 32
  %v1115 = vpop.permute.xlu0 %1114
  %1116 = vrot.lane.b32.xlu0 %v1111, 32
  %v1117 = vpop.permute.xlu0 %1116
  %v1118 = vsel %vm297, %v1115, 0
  %v1120 = vsel %vm297, %v1117, 0
  %1122 = vmatprep.subr.mxu0 0.0
  %1123 = vmatpush1.msra.mxu0 %v64
  %1124 = vmatprep.subr.mxu0 0.0
  %1125 = vmatpush1.msra.mxu0 %v65
  %1126 = vmatprep.subr.mxu0 0.0
  %1127 = vmatpush1.msra.mxu0 %v66
  %1128 = vmatprep.subr.mxu0 0.0
  %1129 = vmatpush1.msra.mxu0 %v67
  %1130 = vmatprep.subr.mxu0 0.0
  %1131 = vmatpush1.msra.mxu0 0.0
  %1132 = vmatprep.subr.mxu0 0.0
  %1133 = vmatpush1.msra.mxu0 0.0
  %1134 = vmatprep.subr.mxu0 0.0
  %1135 = vmatpush1.msra.mxu0 0.0
  %1136 = vmatprep.subr.mxu0 0.0
  %1137 = vmatpush1.msra.mxu0 0.0
  %1138 = vmatprep.subr.mxu0 0.0
  %1139 = vmatpush1.msra.mxu0 0.0
  %1140 = vmatprep.subr.mxu0 0.0
  %1141 = vmatpush1.msra.mxu0 0.0
  %1142 = vmatprep.subr.mxu0 0.0
  %1143 = vmatpush1.msra.mxu0 0.0
  %1144 = vmatprep.subr.mxu0 0.0
  %1145 = vmatpush1.msra.mxu0 0.0
  %1146 = vmatprep.subr.mxu0 0.0
  %1147 = vmatpush1.msra.mxu0 0.0
  %1148 = vmatprep.subr.mxu0 0.0
  %1149 = vmatpush1.msra.mxu0 0.0
  %1150 = vmatprep.subr.mxu0 0.0
  %1151 = vmatpush1.msra.mxu0 0.0
  %1152 = vmatprep.subr.mxu0 0.0
  %1153 = vmatpush1.msra.mxu0 0.0
  %1154 = vmatprep.subr.mxu0 0.0
  %1155 = vmatpush1.msra.mxu0 0.0
  %1156 = vmatprep.subr.mxu0 0.0
  %1157 = vmatpush1.msra.mxu0 0.0
  %1158 = vmatprep.subr.mxu0 0.0
  %1159 = vmatpush1.msra.mxu0 0.0
  %1160 = vmatprep.subr.mxu0 0.0
  %1161 = vmatpush1.msra.mxu0 0.0
  %1162 = vmatprep.subr.mxu0 0.0
  %1163 = vmatpush1.msra.mxu0 0.0
  %1164 = vmatprep.subr.mxu0 0.0
  %1165 = vmatpush1.msra.mxu0 0.0
  %1166 = vmatprep.subr.mxu0 0.0
  %1167 = vmatpush1.msra.mxu0 0.0
  %1168 = vmatprep.subr.mxu0 0.0
  %1169 = vmatpush1.msra.mxu0 0.0
  %1170 = vmatprep.subr.mxu0 0.0
  %1171 = vmatpush1.msra.mxu0 0.0
  %1172 = vmatprep.subr.mxu0 0.0
  %1173 = vmatpush1.msra.mxu0 0.0
  %1174 = vmatprep.subr.mxu0 0.0
  %1175 = vmatpush1.msra.mxu0 0.0
  %1176 = vmatprep.subr.mxu0 0.0
  %1177 = vmatpush1.msra.mxu0 0.0
  %1178 = vmatprep.subr.mxu0 0.0
  %1179 = vmatpush1.msra.mxu0 0.0
  %1180 = vmatprep.subr.mxu0 0.0
  %1181 = vmatpush1.msra.mxu0 0.0
  %1182 = vmatprep.subr.mxu0 0.0
  %1183 = vmatpush1.msra.mxu0 0.0
  %1184 = vmatprep.subr.mxu0 0.0
  %1185 = vmatpush1.msra.mxu0 0.0
  %1186 = vmatprep.mubr.f32.mxu0 0.0
  %1187 = vmatmul.mubr.f32.gmra.mrb[0].mxu0 %v1118
  %v1188 = vpop.f32.mrb[0].mxu0
  %v1189 = vadd.f32 0.0, %v1188
  %v1190 = vpop.f32.mrb[0].mxu0
  %1191 = vmatprep.mubr.f32.mxu0 0.0
  %1192 = vmatmul.mubr.f32.gmra.mrb[0].mxu0 %v1120
  %v1193 = vpop.f32.mrb[0].mxu0
  %v1194 = vadd.f32 0.0, %v1193
  %v1195 = vpop.f32.mrb[0].mxu0
  %1196 = vdwg.mxu0
  %v1197 = vadd.f32 %v279, %v1189
  %v1198 = vadd.f32 %v284, %v1194
  %v1199 = vxor.u32 %v1197, 2147483648
  %v1200 = vxor.u32 %v1198, 2147483648
  %v1201 = vmul.f32 %v1199, 1.442695
  %v1202 = vpow.pop %v1201
  %v1203 = vmul.f32 %v1200, 1.442695
  %v1204 = vpow.pop %v1203
  %v1205 = vadd.f32 %v1202, 1.0
  %v1206 = vadd.f32 %v1204, 1.0
  %v1207 = vrcp.pop %v1205
  %v1208 = vmul.f32 1.0, %v1207
  %v1209 = vrcp.pop %v1206
  %v1210 = vmul.f32 1.0, %v1209
  %v1211 = vtanh.pop %v1197
  %v1212 = vtanh.pop %v1198
  %v1213 = vmul.f32 %v1208, %v1098
  %v1214 = vmul.f32 %v1210, %v1099
  %1217 = vrot.lane.b32.xlu0 %v1211, 64
  %v1218 = vpop.permute.xlu0 %1217
  %1219 = vrot.lane.b32.xlu0 %v1212, 64
  %v1220 = vpop.permute.xlu0 %1219
  %v1223 = vmul.f32 %v1208, %v1218
  %v1224 = vmul.f32 %v1210, %v1220
  %1227 = vrot.lane.b32.xlu0 %v1223, 32
  %v1228 = vpop.permute.xlu0 %1227
  %1229 = vrot.lane.b32.xlu0 %v1224, 32
  %v1230 = vpop.permute.xlu0 %1229
  %v1233 = vadd.f32 %v1213, %v1228
  %v1234 = vadd.f32 %v1214, %v1230
  %v1235 = vtanh.pop %v1233
  %v1236 = vtanh.pop %v1234
  %1239 = vrot.lane.b32.xlu0 %v1235, 64
  %v1240 = vpop.permute.xlu0 %1239
  %1241 = vrot.lane.b32.xlu0 %v1236, 64
  %v1242 = vpop.permute.xlu0 %1241
  %v1245 = vmul.f32 %v1208, %v1240
  %v1246 = vmul.f32 %v1210, %v1242
  %1249 = vrot.lane.b32.xlu0 %v1245, 32
  %v1250 = vpop.permute.xlu0 %1249
  %1251 = vrot.lane.b32.xlu0 %v1246, 32
  %v1252 = vpop.permute.xlu0 %1251
  %v1253 = vsel %vm297, %v1250, 0
  %v1255 = vsel %vm297, %v1252, 0
  %1257 = vmatprep.subr.mxu0 0.0
  %1258 = vmatpush1.msra.mxu0 %v64
  %1259 = vmatprep.subr.mxu0 0.0
  %1260 = vmatpush1.msra.mxu0 %v65
  %1261 = vmatprep.subr.mxu0 0.0
  %1262 = vmatpush1.msra.mxu0 %v66
  %1263 = vmatprep.subr.mxu0 0.0
  %1264 = vmatpush1.msra.mxu0 %v67
  %1265 = vmatprep.subr.mxu0 0.0
  %1266 = vmatpush1.msra.mxu0 0.0
  %1267 = vmatprep.subr.mxu0 0.0
  %1268 = vmatpush1.msra.mxu0 0.0
  %1269 = vmatprep.subr.mxu0 0.0
  %1270 = vmatpush1.msra.mxu0 0.0
  %1271 = vmatprep.subr.mxu0 0.0
  %1272 = vmatpush1.msra.mxu0 0.0
  %1273 = vmatprep.subr.mxu0 0.0
  %1274 = vmatpush1.msra.mxu0 0.0
  %1275 = vmatprep.subr.mxu0 0.0
  %1276 = vmatpush1.msra.mxu0 0.0
  %1277 = vmatprep.subr.mxu0 0.0
  %1278 = vmatpush1.msra.mxu0 0.0
  %1279 = vmatprep.subr.mxu0 0.0
  %1280 = vmatpush1.msra.mxu0 0.0
  %1281 = vmatprep.subr.mxu0 0.0
  %1282 = vmatpush1.msra.mxu0 0.0
  %1283 = vmatprep.subr.mxu0 0.0
  %1284 = vmatpush1.msra.mxu0 0.0
  %1285 = vmatprep.subr.mxu0 0.0
  %1286 = vmatpush1.msra.mxu0 0.0
  %1287 = vmatprep.subr.mxu0 0.0
  %1288 = vmatpush1.msra.mxu0 0.0
  %1289 = vmatprep.subr.mxu0 0.0
  %1290 = vmatpush1.msra.mxu0 0.0
  %1291 = vmatprep.subr.mxu0 0.0
  %1292 = vmatpush1.msra.mxu0 0.0
  %1293 = vmatprep.subr.mxu0 0.0
  %1294 = vmatpush1.msra.mxu0 0.0
  %1295 = vmatprep.subr.mxu0 0.0
  %1296 = vmatpush1.msra.mxu0 0.0
  %1297 = vmatprep.subr.mxu0 0.0
  %1298 = vmatpush1.msra.mxu0 0.0
  %1299 = vmatprep.subr.mxu0 0.0
  %1300 = vmatpush1.msra.mxu0 0.0
  %1301 = vmatprep.subr.mxu0 0.0
  %1302 = vmatpush1.msra.mxu0 0.0
  %1303 = vmatprep.subr.mxu0 0.0
  %1304 = vmatpush1.msra.mxu0 0.0
  %1305 = vmatprep.subr.mxu0 0.0
  %1306 = vmatpush1.msra.mxu0 0.0
  %1307 = vmatprep.subr.mxu0 0.0
  %1308 = vmatpush1.msra.mxu0 0.0
  %1309 = vmatprep.subr.mxu0 0.0
  %1310 = vmatpush1.msra.mxu0 0.0
  %1311 = vmatprep.subr.mxu0 0.0
  %1312 = vmatpush1.msra.mxu0 0.0
  %1313 = vmatprep.subr.mxu0 0.0
  %1314 = vmatpush1.msra.mxu0 0.0
  %1315 = vmatprep.subr.mxu0 0.0
  %1316 = vmatpush1.msra.mxu0 0.0
  %1317 = vmatprep.subr.mxu0 0.0
  %1318 = vmatpush1.msra.mxu0 0.0
  %1319 = vmatprep.subr.mxu0 0.0
  %1320 = vmatpush1.msra.mxu0 0.0
  %1321 = vmatprep.mubr.f32.mxu0 0.0
  %1322 = vmatmul.mubr.f32.gmra.mrb[0].mxu0 %v1253
  %v1323 = vpop.f32.mrb[0].mxu0
  %v1324 = vadd.f32 0.0, %v1323
  %v1325 = vpop.f32.mrb[0].mxu0
  %1326 = vmatprep.mubr.f32.mxu0 0.0
  %1327 = vmatmul.mubr.f32.gmra.mrb[0].mxu0 %v1255
  %v1328 = vpop.f32.mrb[0].mxu0
  %v1329 = vadd.f32 0.0, %v1328
  %v1330 = vpop.f32.mrb[0].mxu0
  %1331 = vdwg.mxu0
  %v1332 = vadd.f32 %v289, %v1324
  %v1333 = vadd.f32 %v294, %v1329
  %v1334 = vxor.u32 %v1332, 2147483648
  %v1335 = vxor.u32 %v1333, 2147483648
  %v1336 = vmul.f32 %v1334, 1.442695
  %v1337 = vpow.pop %v1336
  %v1338 = vmul.f32 %v1335, 1.442695
  %v1339 = vpow.pop %v1338
  %v1340 = vadd.f32 %v1337, 1.0
  %v1341 = vadd.f32 %v1339, 1.0
  %v1342 = vrcp.pop %v1340
  %v1343 = vmul.f32 1.0, %v1342
  %v1344 = vrcp.pop %v1341
  %v1345 = vmul.f32 1.0, %v1344
  %v1346 = vtanh.pop %v1332
  %v1347 = vtanh.pop %v1333
  %v1348 = vmul.f32 %v1343, %v1233
  %v1349 = vmul.f32 %v1345, %v1234
  %1352 = vrot.lane.b32.xlu0 %v1346, 64
  %v1353 = vpop.permute.xlu0 %1352
  %1354 = vrot.lane.b32.xlu0 %v1347, 64
  %v1355 = vpop.permute.xlu0 %1354
  %v1358 = vmul.f32 %v1343, %v1353
  %v1359 = vmul.f32 %v1345, %v1355
  %1362 = vrot.lane.b32.xlu0 %v1358, 32
  %v1363 = vpop.permute.xlu0 %1362
  %1364 = vrot.lane.b32.xlu0 %v1359, 32
  %v1365 = vpop.permute.xlu0 %1364
  %v1368 = vadd.f32 %v1348, %v1363
  %v1369 = vadd.f32 %v1349, %v1365
  %v1370 = vtanh.pop %v1368
  %v1371 = vtanh.pop %v1369
  %1374 = vrot.lane.b32.xlu0 %v1370, 64
  %v1375 = vpop.permute.xlu0 %1374
  %1376 = vrot.lane.b32.xlu0 %v1371, 64
  %v1377 = vpop.permute.xlu0 %1376
  %v1380 = vmul.f32 %v1343, %v1375
  %v1381 = vmul.f32 %v1345, %v1377
  %v1382 = vmax.f32 %v1380, 0.0
  %v1383 = vmax.f32 %v1381, 0.0
  %v1385 = vlaneseq
  %v1386 = vshrl.u32 %v1385, 7
  %v1387 = vsub.s32 0, %v1386
  %v1388 = vrot.slane %v73, %v1387
  %1392 = vrot.lane.b32.xlu0 %v1382, 32
  %v1393 = vpop.permute.xlu0 %1392
  %1394 = vrot.lane.b32.xlu0 %v1383, 32
  %v1395 = vpop.permute.xlu0 %1394
  %v1396 = vsel %vm297, %v1393, 0
  %v1398 = vsel %vm297, %v1395, 0
  %1400 = vmatprep.subr.mxu0 0.0
  %1401 = vmatpush1.msra.mxu0 %v69
  %1402 = vmatprep.subr.mxu0 0.0
  %1403 = vmatpush1.msra.mxu0 %v70
  %1404 = vmatprep.subr.mxu0 0.0
  %1405 = vmatpush1.msra.mxu0 %v71
  %1406 = vmatprep.subr.mxu0 0.0
  %1407 = vmatpush1.msra.mxu0 %v72
  %1408 = vmatprep.subr.mxu0 0.0
  %1409 = vmatpush1.msra.mxu0 0.0
  %1410 = vmatprep.subr.mxu0 0.0
  %1411 = vmatpush1.msra.mxu0 0.0
  %1412 = vmatprep.subr.mxu0 0.0
  %1413 = vmatpush1.msra.mxu0 0.0
  %1414 = vmatprep.subr.mxu0 0.0
  %1415 = vmatpush1.msra.mxu0 0.0
  %1416 = vmatprep.subr.mxu0 0.0
  %1417 = vmatpush1.msra.mxu0 0.0
  %1418 = vmatprep.subr.mxu0 0.0
  %1419 = vmatpush1.msra.mxu0 0.0
  %1420 = vmatprep.subr.mxu0 0.0
  %1421 = vmatpush1.msra.mxu0 0.0
  %1422 = vmatprep.subr.mxu0 0.0
  %1423 = vmatpush1.msra.mxu0 0.0
  %1424 = vmatprep.subr.mxu0 0.0
  %1425 = vmatpush1.msra.mxu0 0.0
  %1426 = vmatprep.subr.mxu0 0.0
  %1427 = vmatpush1.msra.mxu0 0.0
  %1428 = vmatprep.subr.mxu0 0.0
  %1429 = vmatpush1.msra.mxu0 0.0
  %1430 = vmatprep.subr.mxu0 0.0
  %1431 = vmatpush1.msra.mxu0 0.0
  %1432 = vmatprep.subr.mxu0 0.0
  %1433 = vmatpush1.msra.mxu0 0.0
  %1434 = vmatprep.subr.mxu0 0.0
  %1435 = vmatpush1.msra.mxu0 0.0
  %1436 = vmatprep.subr.mxu0 0.0
  %1437 = vmatpush1.msra.mxu0 0.0
  %1438 = vmatprep.subr.mxu0 0.0
  %1439 = vmatpush1.msra.mxu0 0.0
  %1440 = vmatprep.subr.mxu0 0.0
  %1441 = vmatpush1.msra.mxu0 0.0
  %1442 = vmatprep.subr.mxu0 0.0
  %1443 = vmatpush1.msra.mxu0 0.0
  %1444 = vmatprep.subr.mxu0 0.0
  %1445 = vmatpush1.msra.mxu0 0.0
  %1446 = vmatprep.subr.mxu0 0.0
  %1447 = vmatpush1.msra.mxu0 0.0
  %1448 = vmatprep.subr.mxu0 0.0
  %1449 = vmatpush1.msra.mxu0 0.0
  %1450 = vmatprep.subr.mxu0 0.0
  %1451 = vmatpush1.msra.mxu0 0.0
  %1452 = vmatprep.subr.mxu0 0.0
  %1453 = vmatpush1.msra.mxu0 0.0
  %1454 = vmatprep.subr.mxu0 0.0
  %1455 = vmatpush1.msra.mxu0 0.0
  %1456 = vmatprep.subr.mxu0 0.0
  %1457 = vmatpush1.msra.mxu0 0.0
  %1458 = vmatprep.subr.mxu0 0.0
  %1459 = vmatpush1.msra.mxu0 0.0
  %1460 = vmatprep.subr.mxu0 0.0
  %1461 = vmatpush1.msra.mxu0 0.0
  %1462 = vmatprep.subr.mxu0 0.0
  %1463 = vmatpush1.msra.mxu0 0.0
  %1464 = vmatprep.mubr.f32.mxu0 0.0
  %1465 = vmatmul.mubr.f32.gmra.mrb[0].mxu0 %v1396
  %v1466 = vpop.f32.mrb[0].mxu0
  %v1467 = vadd.f32 %v1388, %v1466
  %v1468 = vpop.f32.mrb[0].mxu0
  %1469 = vmatprep.mubr.f32.mxu0 0.0
  %1470 = vmatmul.mubr.f32.gmra.mrb[0].mxu0 %v1398
  %v1471 = vpop.f32.mrb[0].mxu0
  %v1472 = vadd.f32 %v1388, %v1471
  %v1473 = vpop.f32.mrb[0].mxu0
  %1474 = vdwg.mxu0
  %v1475 = vmax.f32 %v1467, 0.0
  %v1476 = vmax.f32 %v1472, 0.0
  %v1478 = vlaneseq
  %v1479 = vshrl.u32 %v1478, 7
  %v1480 = vsub.s32 0, %v1479
  %v1481 = vrot.slane %v90, %v1480
  %1483 = vmatprep.subr.mxu0 0.0
  %1484 = vmatpush1.msra.mxu0 %v74
  %1485 = vmatprep.subr.mxu0 0.0
  %1486 = vmatpush1.msra.mxu0 %v75
  %1487 = vmatprep.subr.mxu0 0.0
  %1488 = vmatpush1.msra.mxu0 %v76
  %1489 = vmatprep.subr.mxu0 0.0
  %1490 = vmatpush1.msra.mxu0 %v77
  %1491 = vmatprep.subr.mxu0 0.0
  %1492 = vmatpush1.msra.mxu0 %v78
  %1493 = vmatprep.subr.mxu0 0.0
  %1494 = vmatpush1.msra.mxu0 %v79
  %1495 = vmatprep.subr.mxu0 0.0
  %1496 = vmatpush1.msra.mxu0 %v80
  %1497 = vmatprep.subr.mxu0 0.0
  %1498 = vmatpush1.msra.mxu0 %v81
  %1499 = vmatprep.subr.mxu0 0.0
  %1500 = vmatpush1.msra.mxu0 %v82
  %1501 = vmatprep.subr.mxu0 0.0
  %1502 = vmatpush1.msra.mxu0 %v83
  %1503 = vmatprep.subr.mxu0 0.0
  %1504 = vmatpush1.msra.mxu0 %v84
  %1505 = vmatprep.subr.mxu0 0.0
  %1506 = vmatpush1.msra.mxu0 %v85
  %1507 = vmatprep.subr.mxu0 0.0
  %1508 = vmatpush1.msra.mxu0 %v86
  %1509 = vmatprep.subr.mxu0 0.0
  %1510 = vmatpush1.msra.mxu0 %v87
  %1511 = vmatprep.subr.mxu0 0.0
  %1512 = vmatpush1.msra.mxu0 %v88
  %1513 = vmatprep.subr.mxu0 0.0
  %1514 = vmatpush1.msra.mxu0 %v89
  %1515 = vmatprep.subr.mxu0 0.0
  %1516 = vmatpush1.msra.mxu0 0.0
  %1517 = vmatprep.subr.mxu0 0.0
  %1518 = vmatpush1.msra.mxu0 0.0
  %1519 = vmatprep.subr.mxu0 0.0
  %1520 = vmatpush1.msra.mxu0 0.0
  %1521 = vmatprep.subr.mxu0 0.0
  %1522 = vmatpush1.msra.mxu0 0.0
  %1523 = vmatprep.subr.mxu0 0.0
  %1524 = vmatpush1.msra.mxu0 0.0
  %1525 = vmatprep.subr.mxu0 0.0
  %1526 = vmatpush1.msra.mxu0 0.0
  %1527 = vmatprep.subr.mxu0 0.0
  %1528 = vmatpush1.msra.mxu0 0.0
  %1529 = vmatprep.subr.mxu0 0.0
  %1530 = vmatpush1.msra.mxu0 0.0
  %1531 = vmatprep.subr.mxu0 0.0
  %1532 = vmatpush1.msra.mxu0 0.0
  %1533 = vmatprep.subr.mxu0 0.0
  %1534 = vmatpush1.msra.mxu0 0.0
  %1535 = vmatprep.subr.mxu0 0.0
  %1536 = vmatpush1.msra.mxu0 0.0
  %1537 = vmatprep.subr.mxu0 0.0
  %1538 = vmatpush1.msra.mxu0 0.0
  %1539 = vmatprep.subr.mxu0 0.0
  %1540 = vmatpush1.msra.mxu0 0.0
  %1541 = vmatprep.subr.mxu0 0.0
  %1542 = vmatpush1.msra.mxu0 0.0
  %1543 = vmatprep.subr.mxu0 0.0
  %1544 = vmatpush1.msra.mxu0 0.0
  %1545 = vmatprep.subr.mxu0 0.0
  %1546 = vmatpush1.msra.mxu0 0.0
  %1547 = vmatprep.mubr.f32.mxu0 0.0
  %1548 = vmatmul.mubr.f32.gmra.mrb[0].mxu0 %v1475
  %v1549 = vpop.f32.mrb[0].mxu0
  %v1550 = vadd.f32 %v1481, %v1549
  %v1551 = vpop.f32.mrb[0].mxu0
  %1552 = vmatprep.mubr.f32.mxu0 0.0
  %1553 = vmatmul.mubr.f32.gmra.mrb[0].mxu0 %v1476
  %v1554 = vpop.f32.mrb[0].mxu0
  %v1555 = vadd.f32 %v1481, %v1554
  %v1556 = vpop.f32.mrb[0].mxu0
  %1557 = vdwg.mxu0
  %v1558 = vmax.f32 %v1550, 0.0
  %v1559 = vmax.f32 %v1555, 0.0
  %v1561 = vlaneseq
  %v1562 = vshrl.u32 %v1561, 7
  %v1563 = vsub.s32 0, %v1562
  %v1564 = vrot.slane %v91, %v1563
  %v1566 = vmul.f32 %v1558, %v1564
  %v1567 = vmul.f32 %v1559, %v1564
  %1568 = vadd.xlane.f32.xlu0 %v1566
  %v1569 = vpop.xlane.xlu0 %1568
  %1570 = vadd.xlane.f32.xlu0 %v1567
  %v1571 = vpop.xlane.xlu0 %1570
  %v1573 = vlaneseq
  %v1574 = vshrl.u32 %v1573, 7
  %v1575 = vsub.s32 0, %v1574
  %v1576 = vrot.slane %v92, %v1575
  %v1578 = vadd.f32 %v1569, %v1576
  %v1579 = vadd.f32 %v1571, %v1576
  %vm1580 = vcmask 7168
  %1581 = vst.msk [vmem:[%s12] sm:$0xff] %vm1580, %v1578
  %1582 = vst.msk [vmem:[%s12 + $0x8] sm:$0xff] %vm1580, %v1579
  // Predicated region
  $region50: #{decoder_forward.1} parent=0 // pred_check
    _
  $region51: #{decoder_forward.1} parent=0 // pred_check_branch
    %1584 = sbr.rel (0) target = $region53
  $region52: #{decoder_forward.1} parent=0 // pred_region
    _
  $region53: #{decoder_forward.1} parent=0 // pred_fallthru
    _
  // Predicated region
  $region54: #{decoder_forward.1} parent=0 // pred_check
    _
  $region55: #{decoder_forward.1} parent=0 // pred_check_branch
    %1586 = sbr.rel (0) target = $region57
  $region56: #{decoder_forward.1} parent=0 // pred_region
    _
  $region57: #{decoder_forward.1} parent=0 // pred_fallthru
    _

</llo_original>
